<compile_context>
chip_gen: v6e
topology: v6e:2x2x1
jax: 0.10.0
libtpu: 0.0.40
codegen_flags: <defaults>
</compile_context>

<pallas_src>
import jax
import jax.numpy as jnp
from jax.experimental import pallas as pl
from jax.experimental.pallas import tpu as pltpu

NUM_CLASSES = 16
INPUT_FEATURES = 1024
H1, H2, H3 = 512, 256, 128
LANE = 128
SUBLANE = 8


def mlp_kernel(x_ref,
               w1_ref, b1_ref,
               w2_ref, b2_ref,
               w3_ref, b3_ref,
               w4_ref, b4_ref,
               o_ref):
    # 4 chained MXU matmuls, all operands resident in VMEM.
    x = x_ref[...].astype(jnp.bfloat16)
    h = jnp.dot(x, w1_ref[...], preferred_element_type=jnp.float32) + b1_ref[...]
    h = jnp.maximum(h, 0.0).astype(jnp.bfloat16)
    h = jnp.dot(h, w2_ref[...], preferred_element_type=jnp.float32) + b2_ref[...]
    h = jnp.maximum(h, 0.0).astype(jnp.bfloat16)
    h = jnp.dot(h, w3_ref[...], preferred_element_type=jnp.float32) + b3_ref[...]
    h = jnp.maximum(h, 0.0).astype(jnp.bfloat16)
    # TODO(synk): dropout(p=0.5) is identity in eval mode; training-mode dropout
    # would use pltpu.prng_seed + pltpu.prng_random_bits to build a keep-mask.
    out = jnp.dot(h, w4_ref[...], preferred_element_type=jnp.float32) + b4_ref[...]
    o_ref[...] = out.astype(o_ref.dtype)


def classification_forward(x, params, *, tile_b=512):
    """x: [B, INPUT_FEATURES] float32. Returns [B, num_classes] float32."""
    (w1, b1), (w2, b2), (w3, b3), (w4, b4) = params
    B, F = x.shape
    assert F == INPUT_FEATURES
    num_classes = w4.shape[1]

    # --- lane-dense output: zero-pad last layer's columns up to a multiple of 128 ---
    nc_pad = ((num_classes + LANE - 1) // LANE) * LANE
    if nc_pad != num_classes:
        w4p = jnp.zeros((w4.shape[0], nc_pad), w4.dtype).at[:, :num_classes].set(w4)
        b4p = jnp.zeros((1, nc_pad), b4.dtype).at[:, :num_classes].set(b4)
    else:
        w4p, b4p = w4, b4

    # --- batch tiling: large MXU-filling tile; pad B up instead of shrinking tile ---
    b_rounded = ((B + SUBLANE - 1) // SUBLANE) * SUBLANE
    tile = min(tile_b, b_rounded)            # cap at (B rounded up to sublane mult)
    tile = max(SUBLANE, (tile // SUBLANE) * SUBLANE)
    grid_b = pl.cdiv(B, tile)
    B_pad = grid_b * tile

    if B_pad != B:
        xp = jnp.zeros((B_pad, F), x.dtype).at[:B].set(x)
    else:
        xp = x

    # bf16 matmul operands; biases stay f32 (added in the f32 accumulator).
    w1b = w1.astype(jnp.bfloat16)
    w2b = w2.astype(jnp.bfloat16)
    w3b = w3.astype(jnp.bfloat16)
    w4b = w4p.astype(jnp.bfloat16)

    # Weights are small and fully VMEM-resident for every batch tile; only the
    # batch axis is tiled across the grid (constant index_map -> fetched once).
    full = lambda shape: pl.BlockSpec(shape, lambda i: (0, 0))

    flops = 2 * B_pad * (F * H1 + H1 * H2 + H2 * H3 + H3 * nc_pad)
    bytes_accessed = (
        int(xp.size) * 4 + B_pad * nc_pad * 4
        + sum(int(w.size) * 2 for w in (w1b, w2b, w3b, w4b))
        + sum(int(b.size) * 4 for b in (b1, b2, b3, b4p)))

    out = pl.pallas_call(
        mlp_kernel,
        out_shape=jax.ShapeDtypeStruct((B_pad, nc_pad), jnp.float32),
        grid_spec=pltpu.PrefetchScalarGridSpec(
            num_scalar_prefetch=0,
            grid=(grid_b,),
            in_specs=[
                pl.BlockSpec((tile, F), lambda i: (i, 0)),
                full(w1b.shape), full(b1.shape),
                full(w2b.shape), full(b2.shape),
                full(w3b.shape), full(b3.shape),
                full(w4b.shape), full(b4p.shape),
            ],
            out_specs=pl.BlockSpec((tile, nc_pad), lambda i: (i, 0)),
        ),
        compiler_params=pltpu.CompilerParams(
            dimension_semantics=("parallel",),
            vmem_limit_bytes=64 << 20),
        cost_estimate=pl.CostEstimate(
            flops=flops, transcendentals=0, bytes_accessed=bytes_accessed),
    )(xp, w1b, b1, w2b, b2, w3b, b3, w4b, b4p)

    # Slice away batch padding and the padded output lanes (free in XLA).
    return out[:B, :num_classes]


def init_params(key):
    """Deterministic init mimicking PyTorch Linear default U[-1/sqrt(in), 1/sqrt(in)].
    Weights stored as [in, out]; biases as [1, out] (2D for TPU layout)."""
    dims = [(INPUT_FEATURES, H1), (H1, H2), (H2, H3), (H3, NUM_CLASSES)]
    params = []
    for (fan_in, fan_out) in dims:
        key, kw, kb = jax.random.split(key, 3)
        bound = 1.0 / jnp.sqrt(fan_in)
        w = jax.random.uniform(kw, (fan_in, fan_out), jnp.float32, -bound, bound)
        b = jax.random.uniform(kb, (1, fan_out), jnp.float32, -bound, bound)
        params.append((w, b))
    return params


def reference_forward(x, params):
    """Pure-JAX reference with the same bf16-operand / f32-accum numerics."""
    h = x.astype(jnp.bfloat16)
    for i, (w, b) in enumerate(params):
        h = jnp.dot(h, w.astype(jnp.bfloat16),
                    preferred_element_type=jnp.float32) + b
        if i < 3:
            h = jnp.maximum(h, 0.0).astype(jnp.bfloat16)
    return h


if __name__ == "__main__":
    key = jax.random.PRNGKey(0)
    key, kx = jax.random.split(key)
    batch = 12   # deliberately not a multiple of 8 to exercise the batch-pad path
    x = jax.random.normal(kx, (batch, INPUT_FEATURES), jnp.float32)
    params = init_params(key)

    out = classification_forward(x, params)
    out = jax.block_until_ready(out)

    ref = reference_forward(x, params)
    assert out.shape == (batch, NUM_CLASSES)
    assert jnp.allclose(out, ref, atol=2e-2, rtol=2e-2), "mismatch vs reference"
    print("KERNEL_OK")
</pallas_src>

<mosaic_0001>
module attributes {stable_mosaic.version = 11 : i64} {
  func.func @mlp_kernel(%arg0: i32, %arg1: memref<16x1024xf32, #tpu.memory_space<vmem>>, %arg2: memref<1024x512xbf16, #tpu.memory_space<vmem>>, %arg3: memref<1x512xf32, #tpu.memory_space<vmem>>, %arg4: memref<512x256xbf16, #tpu.memory_space<vmem>>, %arg5: memref<1x256xf32, #tpu.memory_space<vmem>>, %arg6: memref<256x128xbf16, #tpu.memory_space<vmem>>, %arg7: memref<1x128xf32, #tpu.memory_space<vmem>>, %arg8: memref<128x128xbf16, #tpu.memory_space<vmem>>, %arg9: memref<1x128xf32, #tpu.memory_space<vmem>>, %arg10: memref<16x128xf32, #tpu.memory_space<vmem>>) attributes {dimension_semantics = [#tpu.dimension_semantics<parallel>], iteration_bounds = array<i64: 1>, scalar_prefetch = 0 : i64, scratch_operands = 0 : i64, tpu.core_type = #tpu.core_type<tc>, window_params = [{transform_indices = @transform_0, window_bounds = array<i64: 16, 1024>}, {pipeline_mode = #tpu.pipeline_mode<synchronous>, transform_indices = @transform_1, window_bounds = array<i64: 1024, 512>}, {pipeline_mode = #tpu.pipeline_mode<synchronous>, transform_indices = @transform_2, window_bounds = array<i64: 1, 512>}, {pipeline_mode = #tpu.pipeline_mode<synchronous>, transform_indices = @transform_3, window_bounds = array<i64: 512, 256>}, {pipeline_mode = #tpu.pipeline_mode<synchronous>, transform_indices = @transform_4, window_bounds = array<i64: 1, 256>}, {pipeline_mode = #tpu.pipeline_mode<synchronous>, transform_indices = @transform_5, window_bounds = array<i64: 256, 128>}, {pipeline_mode = #tpu.pipeline_mode<synchronous>, transform_indices = @transform_6, window_bounds = array<i64: 1, 128>}, {pipeline_mode = #tpu.pipeline_mode<synchronous>, transform_indices = @transform_7, window_bounds = array<i64: 128, 128>}, {pipeline_mode = #tpu.pipeline_mode<synchronous>, transform_indices = @transform_8, window_bounds = array<i64: 1, 128>}, {transform_indices = @transform_9, window_bounds = array<i64: 16, 128>}]} {
    %c0 = arith.constant 0 : index
    %c0_0 = arith.constant 0 : index
    %0 = vector.load %arg1[%c0, %c0_0] : memref<16x1024xf32, #tpu.memory_space<vmem>>, vector<16x1024xf32>
    %1 = arith.truncf %0 : vector<16x1024xf32> to vector<16x1024xbf16>
    %c0_1 = arith.constant 0 : index
    %c0_2 = arith.constant 0 : index
    %2 = vector.load %arg2[%c0_1, %c0_2] : memref<1024x512xbf16, #tpu.memory_space<vmem>>, vector<1024x512xbf16>
    %cst = arith.constant dense<0.000000e+00> : vector<16x512xf32>
    %3 = tpu.matmul %1, %2, %cst {dimension_numbers = #tpu.dot_dimension_numbers<[1], [0], [0], [1], [0, 0, 1, 1], [], []>} : vector<16x1024xbf16>, vector<1024x512xbf16>, vector<16x512xf32> -> vector<16x512xf32>
    %c0_3 = arith.constant 0 : index
    %c0_4 = arith.constant 0 : index
    %4 = vector.load %arg3[%c0_3, %c0_4] : memref<1x512xf32, #tpu.memory_space<vmem>>, vector<1x512xf32>
    %5 = vector.broadcast %4 : vector<1x512xf32> to vector<16x512xf32>
    %6 = arith.addf %3, %5 : vector<16x512xf32>
    %cst_5 = arith.constant 0.000000e+00 : f32
    %7 = vector.broadcast %cst_5 : f32 to vector<16x512xf32>
    %8 = arith.maximumf %6, %7 : vector<16x512xf32>
    %9 = arith.truncf %8 : vector<16x512xf32> to vector<16x512xbf16>
    %c0_6 = arith.constant 0 : index
    %c0_7 = arith.constant 0 : index
    %10 = vector.load %arg4[%c0_6, %c0_7] : memref<512x256xbf16, #tpu.memory_space<vmem>>, vector<512x256xbf16>
    %cst_8 = arith.constant dense<0.000000e+00> : vector<16x256xf32>
    %11 = tpu.matmul %9, %10, %cst_8 {dimension_numbers = #tpu.dot_dimension_numbers<[1], [0], [0], [1], [0, 0, 1, 1], [], []>} : vector<16x512xbf16>, vector<512x256xbf16>, vector<16x256xf32> -> vector<16x256xf32>
    %c0_9 = arith.constant 0 : index
    %c0_10 = arith.constant 0 : index
    %12 = vector.load %arg5[%c0_9, %c0_10] : memref<1x256xf32, #tpu.memory_space<vmem>>, vector<1x256xf32>
    %13 = vector.broadcast %12 : vector<1x256xf32> to vector<16x256xf32>
    %14 = arith.addf %11, %13 : vector<16x256xf32>
    %cst_11 = arith.constant 0.000000e+00 : f32
    %15 = vector.broadcast %cst_11 : f32 to vector<16x256xf32>
    %16 = arith.maximumf %14, %15 : vector<16x256xf32>
    %17 = arith.truncf %16 : vector<16x256xf32> to vector<16x256xbf16>
    %c0_12 = arith.constant 0 : index
    %c0_13 = arith.constant 0 : index
    %18 = vector.load %arg6[%c0_12, %c0_13] : memref<256x128xbf16, #tpu.memory_space<vmem>>, vector<256x128xbf16>
    %cst_14 = arith.constant dense<0.000000e+00> : vector<16x128xf32>
    %19 = tpu.matmul %17, %18, %cst_14 {dimension_numbers = #tpu.dot_dimension_numbers<[1], [0], [0], [1], [0, 0, 1, 1], [], []>} : vector<16x256xbf16>, vector<256x128xbf16>, vector<16x128xf32> -> vector<16x128xf32>
    %c0_15 = arith.constant 0 : index
    %c0_16 = arith.constant 0 : index
    %20 = vector.load %arg7[%c0_15, %c0_16] : memref<1x128xf32, #tpu.memory_space<vmem>>, vector<1x128xf32>
    %21 = vector.broadcast %20 : vector<1x128xf32> to vector<16x128xf32>
    %22 = arith.addf %19, %21 : vector<16x128xf32>
    %cst_17 = arith.constant 0.000000e+00 : f32
    %23 = vector.broadcast %cst_17 : f32 to vector<16x128xf32>
    %24 = arith.maximumf %22, %23 : vector<16x128xf32>
    %25 = arith.truncf %24 : vector<16x128xf32> to vector<16x128xbf16>
    %c0_18 = arith.constant 0 : index
    %c0_19 = arith.constant 0 : index
    %26 = vector.load %arg8[%c0_18, %c0_19] : memref<128x128xbf16, #tpu.memory_space<vmem>>, vector<128x128xbf16>
    %cst_20 = arith.constant dense<0.000000e+00> : vector<16x128xf32>
    %27 = tpu.matmul %25, %26, %cst_20 {dimension_numbers = #tpu.dot_dimension_numbers<[1], [0], [0], [1], [0, 0, 1, 1], [], []>} : vector<16x128xbf16>, vector<128x128xbf16>, vector<16x128xf32> -> vector<16x128xf32>
    %c0_21 = arith.constant 0 : index
    %c0_22 = arith.constant 0 : index
    %28 = vector.load %arg9[%c0_21, %c0_22] : memref<1x128xf32, #tpu.memory_space<vmem>>, vector<1x128xf32>
    %29 = vector.broadcast %28 : vector<1x128xf32> to vector<16x128xf32>
    %30 = arith.addf %27, %29 : vector<16x128xf32>
    %c0_23 = arith.constant 0 : index
    %c0_24 = arith.constant 0 : index
    %31 = vector.load %arg10[%c0_23, %c0_24] : memref<16x128xf32, #tpu.memory_space<vmem>>, vector<16x128xf32>
    tpu.vector_store %arg10[%c0_23, %c0_24], %30 {strides = array<i32>} : memref<16x128xf32, #tpu.memory_space<vmem>>, vector<16x128xf32>,
    return
  }
  func.func @transform_0(%arg0: i32) -> (i32, i32) {
    %c0_i32 = arith.constant 0 : i32
    %c0_i32_0 = arith.constant 0 : i32
    return %arg0, %c0_i32 : i32, i32
  }
  func.func @transform_1(%arg0: i32) -> (i32, i32) {
    %c0_i32 = arith.constant 0 : i32
    %c0_i32_0 = arith.constant 0 : i32
    %c0_i32_1 = arith.constant 0 : i32
    return %c0_i32, %c0_i32_0 : i32, i32
  }
  func.func @transform_2(%arg0: i32) -> (i32, i32) {
    %c0_i32 = arith.constant 0 : i32
    %c0_i32_0 = arith.constant 0 : i32
    %c0_i32_1 = arith.constant 0 : i32
    return %c0_i32, %c0_i32_0 : i32, i32
  }
  func.func @transform_3(%arg0: i32) -> (i32, i32) {
    %c0_i32 = arith.constant 0 : i32
    %c0_i32_0 = arith.constant 0 : i32
    %c0_i32_1 = arith.constant 0 : i32
    return %c0_i32, %c0_i32_0 : i32, i32
  }
  func.func @transform_4(%arg0: i32) -> (i32, i32) {
    %c0_i32 = arith.constant 0 : i32
    %c0_i32_0 = arith.constant 0 : i32
    %c0_i32_1 = arith.constant 0 : i32
    return %c0_i32, %c0_i32_0 : i32, i32
  }
  func.func @transform_5(%arg0: i32) -> (i32, i32) {
    %c0_i32 = arith.constant 0 : i32
    %c0_i32_0 = arith.constant 0 : i32
    %c0_i32_1 = arith.constant 0 : i32
    return %c0_i32, %c0_i32_0 : i32, i32
  }
  func.func @transform_6(%arg0: i32) -> (i32, i32) {
    %c0_i32 = arith.constant 0 : i32
    %c0_i32_0 = arith.constant 0 : i32
    %c0_i32_1 = arith.constant 0 : i32
    return %c0_i32, %c0_i32_0 : i32, i32
  }
  func.func @transform_7(%arg0: i32) -> (i32, i32) {
    %c0_i32 = arith.constant 0 : i32
    %c0_i32_0 = arith.constant 0 : i32
    %c0_i32_1 = arith.constant 0 : i32
    return %c0_i32, %c0_i32_0 : i32, i32
  }
  func.func @transform_8(%arg0: i32) -> (i32, i32) {
    %c0_i32 = arith.constant 0 : i32
    %c0_i32_0 = arith.constant 0 : i32
    %c0_i32_1 = arith.constant 0 : i32
    return %c0_i32, %c0_i32_0 : i32, i32
  }
  func.func @transform_9(%arg0: i32) -> (i32, i32) {
    %c0_i32 = arith.constant 0 : i32
    %c0_i32_0 = arith.constant 0 : i32
    return %arg0, %c0_i32 : i32, i32
  }
}

</mosaic_0001>

<llo_original>
// kernel: tpu_custom_call.1
$region0: #{tpu_custom_call.1}
  #allocation0 [shape = 'u32[]', space=smem, size = 0x4, offset = 0x4, fixed_abs, tag = 'smem constant byte address 0x4 - core index']
  #allocation1 [shape = 'u32[144,128]{1,0:T(1,128)}', space=vmem, size = 0x12000, scoped, tag = 'internal scratch']
  %s0 = inlined_call_operand.hbm [shape: f32[16,1024], index: 0, kind: input, shape index: {}]
  %s1 = inlined_call_operand.hbm [shape: bf16[1024,512], index: 1, kind: input, shape index: {}]
  %s2 = inlined_call_operand.hbm [shape: f32[1,512], index: 2, kind: input, shape index: {}]
  %s3 = inlined_call_operand.hbm [shape: bf16[512,256], index: 3, kind: input, shape index: {}]
  %s4 = inlined_call_operand.vmem [shape: f32[1,256], index: 4, kind: input, shape index: {}]
  %s5 = inlined_call_operand.hbm [shape: bf16[256,128], index: 5, kind: input, shape index: {}]
  %s6 = inlined_call_operand.vmem [shape: f32[1,128], index: 6, kind: input, shape index: {}]
  %s7 = inlined_call_operand.hbm [shape: bf16[128,128], index: 7, kind: input, shape index: {}]
  %s8 = inlined_call_operand.vmem [shape: f32[1,128], index: 8, kind: input, shape index: {}]
  %s9 = inlined_call_operand.hbm [shape: f32[16,128], index: 9, kind: output, shape index: {}]
  %s10 = sld [smem:[#allocation0]]
  $region70: #{tpu_custom_call.1} parent=0
    _
  %s12 = ssub.s32 1, %s10
  %s13 = scalar_select 0, %s12, %s10
  $region1: #{tpu_custom_call.1} parent=0
    #allocation2 [shape = 'u8[65536]{0}', space=vmem, size = 0x10000, scoped, tag = 'input window, operand 0, single buffered']
    #allocation3 [shape = 's32[1]{0}', space=sflag, size = 0x4, scoped, tag = 'scoped memory for tpu_custom_call.1']
    #allocation4 [shape = 's32[1]{0}', space=sflag, size = 0x4, scoped, tag = 'scoped memory for tpu_custom_call.1']
    #allocation5 [shape = 'u8[1048576]{0}', space=vmem, size = 0x100000, scoped, tag = 'input window, operand 1, single buffered']
    #allocation6 [shape = 's32[1]{0}', space=sflag, size = 0x4, scoped, tag = 'scoped memory for tpu_custom_call.1']
    #allocation7 [shape = 'u8[2048]{0}', space=vmem, size = 0x800, scoped, tag = 'input window, operand 2, single buffered']
    #allocation8 [shape = 'u8[262144]{0}', space=vmem, size = 0x40000, scoped, tag = 'input window, operand 3, single buffered']
    #allocation9 [shape = 's32[1]{0}', space=sflag, size = 0x4, scoped, tag = 'scoped memory for tpu_custom_call.1']
    #allocation10 [shape = 'u8[65536]{0}', space=vmem, size = 0x10000, scoped, tag = 'input window, operand 5, single buffered']
    #allocation11 [shape = 'u8[32768]{0}', space=vmem, size = 0x8000, scoped, tag = 'input window, operand 7, single buffered']
    #allocation12 [shape = 's32[1]{0}', space=sflag, size = 0x4, scoped, tag = 'scoped memory for tpu_custom_call.1']
    #allocation13 [shape = 'u8[8192]{0}', space=vmem, size = 0x2000, scoped, tag = 'output window, operand 0, single buffered']
    %14 = vsyncpa [#allocation3], 0
    %15 = vsyncpa [#allocation6], 0
    %16 = vsyncpa [#allocation9], 0
    %17 = vsyncpa [#allocation12], 0
    %18 = vsyncpa [#allocation4], 0
    // Predicated region
    $region2: #{tpu_custom_call.1} parent=1 // pred_check
      _
    $region3: #{tpu_custom_call.1} parent=1 // pred_check_branch
      %20 = sbr.rel (0) target = $region5
    $region4: #{tpu_custom_call.1} parent=1 // pred_region
      %s22 = ssub.s32 2048, 2048
      %23 = vsyncadd [#allocation3], %s22
      %s24 = sshll.u32 [#allocation2], 4
      %s25 = int_to_ptr.vmem [resolvable:$true] %s24
      %30 = dma.hbm_to_vmem [thread:$0]  %s0, 2048, %s25, [#allocation3], 1024, 1024, 64
    $region5: #{tpu_custom_call.1} parent=1 // pred_fallthru
      _
    // Predicated region
    $region6: #{tpu_custom_call.1} parent=1 // pred_check
      _
    $region7: #{tpu_custom_call.1} parent=1 // pred_check_branch
      %32 = sbr.rel (0) target = $region9
    $region8: #{tpu_custom_call.1} parent=1 // pred_region
      %s34 = ssub.s32 32768, 32768
      %35 = vsyncadd [#allocation6], %s34
      %s36 = sshll.u32 [#allocation5], 4
      %s37 = int_to_ptr.vmem [resolvable:$true] %s36
      %42 = dma.hbm_to_vmem [thread:$0]  %s1, 32768, %s37, [#allocation6], 256, 256, 16
    $region9: #{tpu_custom_call.1} parent=1 // pred_fallthru
      _
    // Predicated region
    $region10: #{tpu_custom_call.1} parent=1 // pred_check
      _
    $region11: #{tpu_custom_call.1} parent=1 // pred_check_branch
      %44 = sbr.rel (0) target = $region13
    $region12: #{tpu_custom_call.1} parent=1 // pred_region
      %s46 = ssub.s32 64, 64
      %47 = vsyncadd [#allocation6], %s46
      %s49 = sshll.u32 [#allocation7], 4
      %s50 = int_to_ptr.vmem [resolvable:$true] %s49
      %52 = dma.hbm_to_vmem [thread:$0]  %s2, 64, %s50, [#allocation6]
    $region13: #{tpu_custom_call.1} parent=1 // pred_fallthru
      _
    // Predicated region
    $region14: #{tpu_custom_call.1} parent=1 // pred_check
      _
    $region15: #{tpu_custom_call.1} parent=1 // pred_check_branch
      %54 = sbr.rel (0) target = $region17
    $region16: #{tpu_custom_call.1} parent=1 // pred_region
      %s56 = ssub.s32 8192, 8192
      %57 = vsyncadd [#allocation9], %s56
      %s58 = sshll.u32 [#allocation8], 4
      %s59 = int_to_ptr.vmem [resolvable:$true] %s58
      %64 = dma.hbm_to_vmem [thread:$0]  %s3, 8192, %s59, [#allocation9], 128, 128, 8
    $region17: #{tpu_custom_call.1} parent=1 // pred_fallthru
      _
    // Predicated region
    $region18: #{tpu_custom_call.1} parent=1 // pred_check
      _
    $region19: #{tpu_custom_call.1} parent=1 // pred_check_branch
      %66 = sbr.rel (0) target = $region21
    $region20: #{tpu_custom_call.1} parent=1 // pred_region
      _
    $region21: #{tpu_custom_call.1} parent=1 // pred_fallthru
      _
    // Predicated region
    $region22: #{tpu_custom_call.1} parent=1 // pred_check
      _
    $region23: #{tpu_custom_call.1} parent=1 // pred_check_branch
      %68 = sbr.rel (0) target = $region25
    $region24: #{tpu_custom_call.1} parent=1 // pred_region
      %s70 = ssub.s32 2048, 2048
      %71 = vsyncadd [#allocation9], %s70
      %s72 = sshll.u32 [#allocation10], 4
      %s73 = int_to_ptr.vmem [resolvable:$true] %s72
      %78 = dma.hbm_to_vmem [thread:$0]  %s5, 2048, %s73, [#allocation9], 64, 64, 4
    $region25: #{tpu_custom_call.1} parent=1 // pred_fallthru
      _
    // Predicated region
    $region26: #{tpu_custom_call.1} parent=1 // pred_check
      _
    $region27: #{tpu_custom_call.1} parent=1 // pred_check_branch
      %80 = sbr.rel (0) target = $region29
    $region28: #{tpu_custom_call.1} parent=1 // pred_region
      _
    $region29: #{tpu_custom_call.1} parent=1 // pred_fallthru
      _
    // Predicated region
    $region30: #{tpu_custom_call.1} parent=1 // pred_check
      _
    $region31: #{tpu_custom_call.1} parent=1 // pred_check_branch
      %82 = sbr.rel (0) target = $region33
    $region32: #{tpu_custom_call.1} parent=1 // pred_region
      %s84 = ssub.s32 1024, 1024
      %85 = vsyncadd [#allocation12], %s84
      %s86 = sshll.u32 [#allocation11], 4
      %s87 = int_to_ptr.vmem [resolvable:$true] %s86
      %92 = dma.hbm_to_vmem [thread:$0]  %s7, 1024, %s87, [#allocation12], 64, 64, 4
    $region33: #{tpu_custom_call.1} parent=1 // pred_fallthru
      _
    // Predicated region
    $region34: #{tpu_custom_call.1} parent=1 // pred_check
      _
    $region35: #{tpu_custom_call.1} parent=1 // pred_check_branch
      %94 = sbr.rel (0) target = $region37
    $region36: #{tpu_custom_call.1} parent=1 // pred_region
      _
    $region37: #{tpu_custom_call.1} parent=1 // pred_fallthru
      _
    // Predicated region
    $region38: #{tpu_custom_call.1} parent=1 // pred_check
      _
    $region39: #{tpu_custom_call.1} parent=1 // pred_check_branch
      %96 = sbr.rel (0) target = $region41
    $region40: #{tpu_custom_call.1} parent=1 // pred_region
      %97 = dma.done [#allocation3], 2048
    $region41: #{tpu_custom_call.1} parent=1 // pred_fallthru
      _
    // Predicated region
    $region42: #{tpu_custom_call.1} parent=1 // pred_check
      _
    $region43: #{tpu_custom_call.1} parent=1 // pred_check_branch
      %99 = sbr.rel (0) target = $region45
    $region44: #{tpu_custom_call.1} parent=1 // pred_region
      %100 = dma.done [#allocation6], 32768
    $region45: #{tpu_custom_call.1} parent=1 // pred_fallthru
      _
    // Predicated region
    $region46: #{tpu_custom_call.1} parent=1 // pred_check
      _
    $region47: #{tpu_custom_call.1} parent=1 // pred_check_branch
      %102 = sbr.rel (0) target = $region49
    $region48: #{tpu_custom_call.1} parent=1 // pred_region
      %103 = dma.done [#allocation6], 64
    $region49: #{tpu_custom_call.1} parent=1 // pred_fallthru
      _
    // Predicated region
    $region50: #{tpu_custom_call.1} parent=1 // pred_check
      _
    $region51: #{tpu_custom_call.1} parent=1 // pred_check_branch
      %105 = sbr.rel (0) target = $region53
    $region52: #{tpu_custom_call.1} parent=1 // pred_region
      %106 = dma.done [#allocation9], 8192
    $region53: #{tpu_custom_call.1} parent=1 // pred_fallthru
      _
    // Predicated region
    $region54: #{tpu_custom_call.1} parent=1 // pred_check
      _
    $region55: #{tpu_custom_call.1} parent=1 // pred_check_branch
      %108 = sbr.rel (0) target = $region57
    $region56: #{tpu_custom_call.1} parent=1 // pred_region
      %109 = dma.done [#allocation9], 2048
    $region57: #{tpu_custom_call.1} parent=1 // pred_fallthru
      _
    // Predicated region
    $region58: #{tpu_custom_call.1} parent=1 // pred_check
      _
    $region59: #{tpu_custom_call.1} parent=1 // pred_check_branch
      %111 = sbr.rel (0) target = $region61
    $region60: #{tpu_custom_call.1} parent=1 // pred_region
      %112 = dma.done [#allocation12], 1024
    $region61: #{tpu_custom_call.1} parent=1 // pred_fallthru
      _
    %v114 = vld [vmem:[#allocation2] sm:$0xff]
    %v115 = vld [vmem:[#allocation2 + $0x8] sm:$0xff]
    %v116 = vld [vmem:[#allocation2 + $0x10] sm:$0xff]
    %v117 = vld [vmem:[#allocation2 + $0x18] sm:$0xff]
    %v118 = vld [vmem:[#allocation2 + $0x20] sm:$0xff]
    %v119 = vld [vmem:[#allocation2 + $0x28] sm:$0xff]
    %v120 = vld [vmem:[#allocation2 + $0x30] sm:$0xff]
    %v121 = vld [vmem:[#allocation2 + $0x38] sm:$0xff]
    %v122 = vld [vmem:[#allocation2 + $0x40] sm:$0xff]
    %v123 = vld [vmem:[#allocation2 + $0x48] sm:$0xff]
    %v124 = vld [vmem:[#allocation2 + $0x50] sm:$0xff]
    %v125 = vld [vmem:[#allocation2 + $0x58] sm:$0xff]
    %v126 = vld [vmem:[#allocation2 + $0x60] sm:$0xff]
    %v127 = vld [vmem:[#allocation2 + $0x68] sm:$0xff]
    %v128 = vld [vmem:[#allocation2 + $0x70] sm:$0xff]
    %v129 = vld [vmem:[#allocation2 + $0x78] sm:$0xff]
    %v130 = vpack.c.bf16 %v122, %v114
    %v131 = vpack.c.bf16 %v123, %v115
    %v132 = vpack.c.bf16 %v124, %v116
    %v133 = vpack.c.bf16 %v125, %v117
    %v134 = vpack.c.bf16 %v126, %v118
    %v135 = vpack.c.bf16 %v127, %v119
    %v136 = vpack.c.bf16 %v128, %v120
    %v137 = vpack.c.bf16 %v129, %v121
    %v138 = vld [vmem:[#allocation5] sm:$0xff]
    %v139 = vld [vmem:[#allocation5 + $0x8] sm:$0xff]
    %v140 = vld [vmem:[#allocation5 + $0x10] sm:$0xff]
    %v141 = vld [vmem:[#allocation5 + $0x18] sm:$0xff]
    %v142 = vld [vmem:[#allocation5 + $0x20] sm:$0xff]
    %v143 = vld [vmem:[#allocation5 + $0x28] sm:$0xff]
    %v144 = vld [vmem:[#allocation5 + $0x30] sm:$0xff]
    %v145 = vld [vmem:[#allocation5 + $0x38] sm:$0xff]
    %v146 = vld [vmem:[#allocation5 + $0x40] sm:$0xff]
    %v147 = vld [vmem:[#allocation5 + $0x48] sm:$0xff]
    %v148 = vld [vmem:[#allocation5 + $0x50] sm:$0xff]
    %v149 = vld [vmem:[#allocation5 + $0x58] sm:$0xff]
    %v150 = vld [vmem:[#allocation5 + $0x60] sm:$0xff]
    %v151 = vld [vmem:[#allocation5 + $0x68] sm:$0xff]
    %v152 = vld [vmem:[#allocation5 + $0x70] sm:$0xff]
    %v153 = vld [vmem:[#allocation5 + $0x78] sm:$0xff]
    %v154 = vld [vmem:[#allocation5 + $0x80] sm:$0xff]
    %v155 = vld [vmem:[#allocation5 + $0x88] sm:$0xff]
    %v156 = vld [vmem:[#allocation5 + $0x90] sm:$0xff]
    %v157 = vld [vmem:[#allocation5 + $0x98] sm:$0xff]
    %v158 = vld [vmem:[#allocation5 + $0xa0] sm:$0xff]
    %v159 = vld [vmem:[#allocation5 + $0xa8] sm:$0xff]
    %v160 = vld [vmem:[#allocation5 + $0xb0] sm:$0xff]
    %v161 = vld [vmem:[#allocation5 + $0xb8] sm:$0xff]
    %v162 = vld [vmem:[#allocation5 + $0xc0] sm:$0xff]
    %v163 = vld [vmem:[#allocation5 + $0xc8] sm:$0xff]
    %v164 = vld [vmem:[#allocation5 + $0xd0] sm:$0xff]
    %v165 = vld [vmem:[#allocation5 + $0xd8] sm:$0xff]
    %v166 = vld [vmem:[#allocation5 + $0xe0] sm:$0xff]
    %v167 = vld [vmem:[#allocation5 + $0xe8] sm:$0xff]
    %v168 = vld [vmem:[#allocation5 + $0xf0] sm:$0xff]
    %v169 = vld [vmem:[#allocation5 + $0xf8] sm:$0xff]
    %v170 = vld [vmem:[#allocation5 + $0x100] sm:$0xff]
    %v171 = vld [vmem:[#allocation5 + $0x108] sm:$0xff]
    %v172 = vld [vmem:[#allocation5 + $0x110] sm:$0xff]
    %v173 = vld [vmem:[#allocation5 + $0x118] sm:$0xff]
    %v174 = vld [vmem:[#allocation5 + $0x120] sm:$0xff]
    %v175 = vld [vmem:[#allocation5 + $0x128] sm:$0xff]
    %v176 = vld [vmem:[#allocation5 + $0x130] sm:$0xff]
    %v177 = vld [vmem:[#allocation5 + $0x138] sm:$0xff]
    %v178 = vld [vmem:[#allocation5 + $0x140] sm:$0xff]
    %v179 = vld [vmem:[#allocation5 + $0x148] sm:$0xff]
    %v180 = vld [vmem:[#allocation5 + $0x150] sm:$0xff]
    %v181 = vld [vmem:[#allocation5 + $0x158] sm:$0xff]
    %v182 = vld [vmem:[#allocation5 + $0x160] sm:$0xff]
    %v183 = vld [vmem:[#allocation5 + $0x168] sm:$0xff]
    %v184 = vld [vmem:[#allocation5 + $0x170] sm:$0xff]
    %v185 = vld [vmem:[#allocation5 + $0x178] sm:$0xff]
    %v186 = vld [vmem:[#allocation5 + $0x180] sm:$0xff]
    %v187 = vld [vmem:[#allocation5 + $0x188] sm:$0xff]
    %v188 = vld [vmem:[#allocation5 + $0x190] sm:$0xff]
    %v189 = vld [vmem:[#allocation5 + $0x198] sm:$0xff]
    %v190 = vld [vmem:[#allocation5 + $0x1a0] sm:$0xff]
    %v191 = vld [vmem:[#allocation5 + $0x1a8] sm:$0xff]
    %v192 = vld [vmem:[#allocation5 + $0x1b0] sm:$0xff]
    %v193 = vld [vmem:[#allocation5 + $0x1b8] sm:$0xff]
    %v194 = vld [vmem:[#allocation5 + $0x1c0] sm:$0xff]
    %v195 = vld [vmem:[#allocation5 + $0x1c8] sm:$0xff]
    %v196 = vld [vmem:[#allocation5 + $0x1d0] sm:$0xff]
    %v197 = vld [vmem:[#allocation5 + $0x1d8] sm:$0xff]
    %v198 = vld [vmem:[#allocation5 + $0x1e0] sm:$0xff]
    %v199 = vld [vmem:[#allocation5 + $0x1e8] sm:$0xff]
    %v200 = vld [vmem:[#allocation5 + $0x1f0] sm:$0xff]
    %v201 = vld [vmem:[#allocation5 + $0x1f8] sm:$0xff]
    %v202 = vld [vmem:[#allocation5 + $0x200] sm:$0xff]
    %v203 = vld [vmem:[#allocation5 + $0x208] sm:$0xff]
    %v204 = vld [vmem:[#allocation5 + $0x210] sm:$0xff]
    %v205 = vld [vmem:[#allocation5 + $0x218] sm:$0xff]
    %v206 = vld [vmem:[#allocation5 + $0x220] sm:$0xff]
    %v207 = vld [vmem:[#allocation5 + $0x228] sm:$0xff]
    %v208 = vld [vmem:[#allocation5 + $0x230] sm:$0xff]
    %v209 = vld [vmem:[#allocation5 + $0x238] sm:$0xff]
    %v210 = vld [vmem:[#allocation5 + $0x240] sm:$0xff]
    %v211 = vld [vmem:[#allocation5 + $0x248] sm:$0xff]
    %v212 = vld [vmem:[#allocation5 + $0x250] sm:$0xff]
    %v213 = vld [vmem:[#allocation5 + $0x258] sm:$0xff]
    %v214 = vld [vmem:[#allocation5 + $0x260] sm:$0xff]
    %v215 = vld [vmem:[#allocation5 + $0x268] sm:$0xff]
    %v216 = vld [vmem:[#allocation5 + $0x270] sm:$0xff]
    %v217 = vld [vmem:[#allocation5 + $0x278] sm:$0xff]
    %v218 = vld [vmem:[#allocation5 + $0x280] sm:$0xff]
    %v219 = vld [vmem:[#allocation5 + $0x288] sm:$0xff]
    %v220 = vld [vmem:[#allocation5 + $0x290] sm:$0xff]
    %v221 = vld [vmem:[#allocation5 + $0x298] sm:$0xff]
    %v222 = vld [vmem:[#allocation5 + $0x2a0] sm:$0xff]
    %v223 = vld [vmem:[#allocation5 + $0x2a8] sm:$0xff]
    %v224 = vld [vmem:[#allocation5 + $0x2b0] sm:$0xff]
    %v225 = vld [vmem:[#allocation5 + $0x2b8] sm:$0xff]
    %v226 = vld [vmem:[#allocation5 + $0x2c0] sm:$0xff]
    %v227 = vld [vmem:[#allocation5 + $0x2c8] sm:$0xff]
    %v228 = vld [vmem:[#allocation5 + $0x2d0] sm:$0xff]
    %v229 = vld [vmem:[#allocation5 + $0x2d8] sm:$0xff]
    %v230 = vld [vmem:[#allocation5 + $0x2e0] sm:$0xff]
    %v231 = vld [vmem:[#allocation5 + $0x2e8] sm:$0xff]
    %v232 = vld [vmem:[#allocation5 + $0x2f0] sm:$0xff]
    %v233 = vld [vmem:[#allocation5 + $0x2f8] sm:$0xff]
    %v234 = vld [vmem:[#allocation5 + $0x300] sm:$0xff]
    %v235 = vld [vmem:[#allocation5 + $0x308] sm:$0xff]
    %v236 = vld [vmem:[#allocation5 + $0x310] sm:$0xff]
    %v237 = vld [vmem:[#allocation5 + $0x318] sm:$0xff]
    %v238 = vld [vmem:[#allocation5 + $0x320] sm:$0xff]
    %v239 = vld [vmem:[#allocation5 + $0x328] sm:$0xff]
    %v240 = vld [vmem:[#allocation5 + $0x330] sm:$0xff]
    %v241 = vld [vmem:[#allocation5 + $0x338] sm:$0xff]
    %v242 = vld [vmem:[#allocation5 + $0x340] sm:$0xff]
    %v243 = vld [vmem:[#allocation5 + $0x348] sm:$0xff]
    %v244 = vld [vmem:[#allocation5 + $0x350] sm:$0xff]
    %v245 = vld [vmem:[#allocation5 + $0x358] sm:$0xff]
    %v246 = vld [vmem:[#allocation5 + $0x360] sm:$0xff]
    %v247 = vld [vmem:[#allocation5 + $0x368] sm:$0xff]
    %v248 = vld [vmem:[#allocation5 + $0x370] sm:$0xff]
    %v249 = vld [vmem:[#allocation5 + $0x378] sm:$0xff]
    %v250 = vld [vmem:[#allocation5 + $0x380] sm:$0xff]
    %v251 = vld [vmem:[#allocation5 + $0x388] sm:$0xff]
    %v252 = vld [vmem:[#allocation5 + $0x390] sm:$0xff]
    %v253 = vld [vmem:[#allocation5 + $0x398] sm:$0xff]
    %v254 = vld [vmem:[#allocation5 + $0x3a0] sm:$0xff]
    %v255 = vld [vmem:[#allocation5 + $0x3a8] sm:$0xff]
    %v256 = vld [vmem:[#allocation5 + $0x3b0] sm:$0xff]
    %v257 = vld [vmem:[#allocation5 + $0x3b8] sm:$0xff]
    %v258 = vld [vmem:[#allocation5 + $0x3c0] sm:$0xff]
    %v259 = vld [vmem:[#allocation5 + $0x3c8] sm:$0xff]
    %v260 = vld [vmem:[#allocation5 + $0x3d0] sm:$0xff]
    %v261 = vld [vmem:[#allocation5 + $0x3d8] sm:$0xff]
    %v262 = vld [vmem:[#allocation5 + $0x3e0] sm:$0xff]
    %v263 = vld [vmem:[#allocation5 + $0x3e8] sm:$0xff]
    %v264 = vld [vmem:[#allocation5 + $0x3f0] sm:$0xff]
    %v265 = vld [vmem:[#allocation5 + $0x3f8] sm:$0xff]
    %v266 = vld [vmem:[#allocation5 + $0x400] sm:$0xff]
    %v267 = vld [vmem:[#allocation5 + $0x408] sm:$0xff]
    %v268 = vld [vmem:[#allocation5 + $0x410] sm:$0xff]
    %v269 = vld [vmem:[#allocation5 + $0x418] sm:$0xff]
    %v270 = vld [vmem:[#allocation5 + $0x420] sm:$0xff]
    %v271 = vld [vmem:[#allocation5 + $0x428] sm:$0xff]
    %v272 = vld [vmem:[#allocation5 + $0x430] sm:$0xff]
    %v273 = vld [vmem:[#allocation5 + $0x438] sm:$0xff]
    %v274 = vld [vmem:[#allocation5 + $0x440] sm:$0xff]
    %v275 = vld [vmem:[#allocation5 + $0x448] sm:$0xff]
    %v276 = vld [vmem:[#allocation5 + $0x450] sm:$0xff]
    %v277 = vld [vmem:[#allocation5 + $0x458] sm:$0xff]
    %v278 = vld [vmem:[#allocation5 + $0x460] sm:$0xff]
    %v279 = vld [vmem:[#allocation5 + $0x468] sm:$0xff]
    %v280 = vld [vmem:[#allocation5 + $0x470] sm:$0xff]
    %v281 = vld [vmem:[#allocation5 + $0x478] sm:$0xff]
    %v282 = vld [vmem:[#allocation5 + $0x480] sm:$0xff]
    %v283 = vld [vmem:[#allocation5 + $0x488] sm:$0xff]
    %v284 = vld [vmem:[#allocation5 + $0x490] sm:$0xff]
    %v285 = vld [vmem:[#allocation5 + $0x498] sm:$0xff]
    %v286 = vld [vmem:[#allocation5 + $0x4a0] sm:$0xff]
    %v287 = vld [vmem:[#allocation5 + $0x4a8] sm:$0xff]
    %v288 = vld [vmem:[#allocation5 + $0x4b0] sm:$0xff]
    %v289 = vld [vmem:[#allocation5 + $0x4b8] sm:$0xff]
    %v290 = vld [vmem:[#allocation5 + $0x4c0] sm:$0xff]
    %v291 = vld [vmem:[#allocation5 + $0x4c8] sm:$0xff]
    %v292 = vld [vmem:[#allocation5 + $0x4d0] sm:$0xff]
    %v293 = vld [vmem:[#allocation5 + $0x4d8] sm:$0xff]
    %v294 = vld [vmem:[#allocation5 + $0x4e0] sm:$0xff]
    %v295 = vld [vmem:[#allocation5 + $0x4e8] sm:$0xff]
    %v296 = vld [vmem:[#allocation5 + $0x4f0] sm:$0xff]
    %v297 = vld [vmem:[#allocation5 + $0x4f8] sm:$0xff]
    %v298 = vld [vmem:[#allocation5 + $0x500] sm:$0xff]
    %v299 = vld [vmem:[#allocation5 + $0x508] sm:$0xff]
    %v300 = vld [vmem:[#allocation5 + $0x510] sm:$0xff]
    %v301 = vld [vmem:[#allocation5 + $0x518] sm:$0xff]
    %v302 = vld [vmem:[#allocation5 + $0x520] sm:$0xff]
    %v303 = vld [vmem:[#allocation5 + $0x528] sm:$0xff]
    %v304 = vld [vmem:[#allocation5 + $0x530] sm:$0xff]
    %v305 = vld [vmem:[#allocation5 + $0x538] sm:$0xff]
    %v306 = vld [vmem:[#allocation5 + $0x540] sm:$0xff]
    %v307 = vld [vmem:[#allocation5 + $0x548] sm:$0xff]
    %v308 = vld [vmem:[#allocation5 + $0x550] sm:$0xff]
    %v309 = vld [vmem:[#allocation5 + $0x558] sm:$0xff]
    %v310 = vld [vmem:[#allocation5 + $0x560] sm:$0xff]
    %v311 = vld [vmem:[#allocation5 + $0x568] sm:$0xff]
    %v312 = vld [vmem:[#allocation5 + $0x570] sm:$0xff]
    %v313 = vld [vmem:[#allocation5 + $0x578] sm:$0xff]
    %v314 = vld [vmem:[#allocation5 + $0x580] sm:$0xff]
    %v315 = vld [vmem:[#allocation5 + $0x588] sm:$0xff]
    %v316 = vld [vmem:[#allocation5 + $0x590] sm:$0xff]
    %v317 = vld [vmem:[#allocation5 + $0x598] sm:$0xff]
    %v318 = vld [vmem:[#allocation5 + $0x5a0] sm:$0xff]
    %v319 = vld [vmem:[#allocation5 + $0x5a8] sm:$0xff]
    %v320 = vld [vmem:[#allocation5 + $0x5b0] sm:$0xff]
    %v321 = vld [vmem:[#allocation5 + $0x5b8] sm:$0xff]
    %v322 = vld [vmem:[#allocation5 + $0x5c0] sm:$0xff]
    %v323 = vld [vmem:[#allocation5 + $0x5c8] sm:$0xff]
    %v324 = vld [vmem:[#allocation5 + $0x5d0] sm:$0xff]
    %v325 = vld [vmem:[#allocation5 + $0x5d8] sm:$0xff]
    %v326 = vld [vmem:[#allocation5 + $0x5e0] sm:$0xff]
    %v327 = vld [vmem:[#allocation5 + $0x5e8] sm:$0xff]
    %v328 = vld [vmem:[#allocation5 + $0x5f0] sm:$0xff]
    %v329 = vld [vmem:[#allocation5 + $0x5f8] sm:$0xff]
    %v330 = vld [vmem:[#allocation5 + $0x600] sm:$0xff]
    %v331 = vld [vmem:[#allocation5 + $0x608] sm:$0xff]
    %v332 = vld [vmem:[#allocation5 + $0x610] sm:$0xff]
    %v333 = vld [vmem:[#allocation5 + $0x618] sm:$0xff]
    %v334 = vld [vmem:[#allocation5 + $0x620] sm:$0xff]
    %v335 = vld [vmem:[#allocation5 + $0x628] sm:$0xff]
    %v336 = vld [vmem:[#allocation5 + $0x630] sm:$0xff]
    %v337 = vld [vmem:[#allocation5 + $0x638] sm:$0xff]
    %v338 = vld [vmem:[#allocation5 + $0x640] sm:$0xff]
    %v339 = vld [vmem:[#allocation5 + $0x648] sm:$0xff]
    %v340 = vld [vmem:[#allocation5 + $0x650] sm:$0xff]
    %v341 = vld [vmem:[#allocation5 + $0x658] sm:$0xff]
    %v342 = vld [vmem:[#allocation5 + $0x660] sm:$0xff]
    %v343 = vld [vmem:[#allocation5 + $0x668] sm:$0xff]
    %v344 = vld [vmem:[#allocation5 + $0x670] sm:$0xff]
    %v345 = vld [vmem:[#allocation5 + $0x678] sm:$0xff]
    %v346 = vld [vmem:[#allocation5 + $0x680] sm:$0xff]
    %v347 = vld [vmem:[#allocation5 + $0x688] sm:$0xff]
    %v348 = vld [vmem:[#allocation5 + $0x690] sm:$0xff]
    %v349 = vld [vmem:[#allocation5 + $0x698] sm:$0xff]
    %v350 = vld [vmem:[#allocation5 + $0x6a0] sm:$0xff]
    %v351 = vld [vmem:[#allocation5 + $0x6a8] sm:$0xff]
    %v352 = vld [vmem:[#allocation5 + $0x6b0] sm:$0xff]
    %v353 = vld [vmem:[#allocation5 + $0x6b8] sm:$0xff]
    %v354 = vld [vmem:[#allocation5 + $0x6c0] sm:$0xff]
    %v355 = vld [vmem:[#allocation5 + $0x6c8] sm:$0xff]
    %v356 = vld [vmem:[#allocation5 + $0x6d0] sm:$0xff]
    %v357 = vld [vmem:[#allocation5 + $0x6d8] sm:$0xff]
    %v358 = vld [vmem:[#allocation5 + $0x6e0] sm:$0xff]
    %v359 = vld [vmem:[#allocation5 + $0x6e8] sm:$0xff]
    %v360 = vld [vmem:[#allocation5 + $0x6f0] sm:$0xff]
    %v361 = vld [vmem:[#allocation5 + $0x6f8] sm:$0xff]
    %v362 = vld [vmem:[#allocation5 + $0x700] sm:$0xff]
    %v363 = vld [vmem:[#allocation5 + $0x708] sm:$0xff]
    %v364 = vld [vmem:[#allocation5 + $0x710] sm:$0xff]
    %v365 = vld [vmem:[#allocation5 + $0x718] sm:$0xff]
    %v366 = vld [vmem:[#allocation5 + $0x720] sm:$0xff]
    %v367 = vld [vmem:[#allocation5 + $0x728] sm:$0xff]
    %v368 = vld [vmem:[#allocation5 + $0x730] sm:$0xff]
    %v369 = vld [vmem:[#allocation5 + $0x738] sm:$0xff]
    %v370 = vld [vmem:[#allocation5 + $0x740] sm:$0xff]
    %v371 = vld [vmem:[#allocation5 + $0x748] sm:$0xff]
    %v372 = vld [vmem:[#allocation5 + $0x750] sm:$0xff]
    %v373 = vld [vmem:[#allocation5 + $0x758] sm:$0xff]
    %v374 = vld [vmem:[#allocation5 + $0x760] sm:$0xff]
    %v375 = vld [vmem:[#allocation5 + $0x768] sm:$0xff]
    %v376 = vld [vmem:[#allocation5 + $0x770] sm:$0xff]
    %v377 = vld [vmem:[#allocation5 + $0x778] sm:$0xff]
    %v378 = vld [vmem:[#allocation5 + $0x780] sm:$0xff]
    %v379 = vld [vmem:[#allocation5 + $0x788] sm:$0xff]
    %v380 = vld [vmem:[#allocation5 + $0x790] sm:$0xff]
    %v381 = vld [vmem:[#allocation5 + $0x798] sm:$0xff]
    %v382 = vld [vmem:[#allocation5 + $0x7a0] sm:$0xff]
    %v383 = vld [vmem:[#allocation5 + $0x7a8] sm:$0xff]
    %v384 = vld [vmem:[#allocation5 + $0x7b0] sm:$0xff]
    %v385 = vld [vmem:[#allocation5 + $0x7b8] sm:$0xff]
    %v386 = vld [vmem:[#allocation5 + $0x7c0] sm:$0xff]
    %v387 = vld [vmem:[#allocation5 + $0x7c8] sm:$0xff]
    %v388 = vld [vmem:[#allocation5 + $0x7d0] sm:$0xff]
    %v389 = vld [vmem:[#allocation5 + $0x7d8] sm:$0xff]
    %v390 = vld [vmem:[#allocation5 + $0x7e0] sm:$0xff]
    %v391 = vld [vmem:[#allocation5 + $0x7e8] sm:$0xff]
    %v392 = vld [vmem:[#allocation5 + $0x7f0] sm:$0xff]
    %v393 = vld [vmem:[#allocation5 + $0x7f8] sm:$0xff]
    %v394 = vld [vmem:[#allocation7] sm:$0xf]
    %v396 = vlaneseq
    %v397 = vshrl.u32 %v396, 7
    %v398 = vsub.s32 0, %v397
    %v399 = vrot.slane %v394, %v398
    %v400 = vlaneseq
    %v401 = vshrl.u32 %v400, 7
    %v402 = vsub.s32 1, %v401
    %v403 = vrot.slane %v394, %v402
    %v404 = vlaneseq
    %v405 = vshrl.u32 %v404, 7
    %v406 = vsub.s32 2, %v405
    %v407 = vrot.slane %v394, %v406
    %v408 = vlaneseq
    %v409 = vshrl.u32 %v408, 7
    %v410 = vsub.s32 3, %v409
    %v411 = vrot.slane %v394, %v410
    %v672 = vunpack.c.l.b16 %v138
    %v673 = vunpack.c.h.b16 %v138
    %v674 = vunpack.c.l.b16 %v139
    %v675 = vunpack.c.h.b16 %v139
    %v676 = vunpack.c.l.b16 %v140
    %v677 = vunpack.c.h.b16 %v140
    %v678 = vunpack.c.l.b16 %v141
    %v679 = vunpack.c.h.b16 %v141
    %v680 = vunpack.c.l.b16 %v142
    %v681 = vunpack.c.h.b16 %v142
    %v682 = vunpack.c.l.b16 %v143
    %v683 = vunpack.c.h.b16 %v143
    %v684 = vunpack.c.l.b16 %v144
    %v685 = vunpack.c.h.b16 %v144
    %v686 = vunpack.c.l.b16 %v145
    %v687 = vunpack.c.h.b16 %v145
    %v688 = vunpack.c.l.b16 %v146
    %v689 = vunpack.c.h.b16 %v146
    %v690 = vunpack.c.l.b16 %v147
    %v691 = vunpack.c.h.b16 %v147
    %v692 = vunpack.c.l.b16 %v148
    %v693 = vunpack.c.h.b16 %v148
    %v694 = vunpack.c.l.b16 %v149
    %v695 = vunpack.c.h.b16 %v149
    %v696 = vunpack.c.l.b16 %v150
    %v697 = vunpack.c.h.b16 %v150
    %v698 = vunpack.c.l.b16 %v151
    %v699 = vunpack.c.h.b16 %v151
    %v700 = vunpack.c.l.b16 %v152
    %v701 = vunpack.c.h.b16 %v152
    %v702 = vunpack.c.l.b16 %v153
    %v703 = vunpack.c.h.b16 %v153
    %v704 = vunpack.c.l.b16 %v154
    %v705 = vunpack.c.h.b16 %v154
    %v706 = vunpack.c.l.b16 %v155
    %v707 = vunpack.c.h.b16 %v155
    %v708 = vunpack.c.l.b16 %v156
    %v709 = vunpack.c.h.b16 %v156
    %v710 = vunpack.c.l.b16 %v157
    %v711 = vunpack.c.h.b16 %v157
    %v712 = vunpack.c.l.b16 %v158
    %v713 = vunpack.c.h.b16 %v158
    %v714 = vunpack.c.l.b16 %v159
    %v715 = vunpack.c.h.b16 %v159
    %v716 = vunpack.c.l.b16 %v160
    %v717 = vunpack.c.h.b16 %v160
    %v718 = vunpack.c.l.b16 %v161
    %v719 = vunpack.c.h.b16 %v161
    %v720 = vunpack.c.l.b16 %v162
    %v721 = vunpack.c.h.b16 %v162
    %v722 = vunpack.c.l.b16 %v163
    %v723 = vunpack.c.h.b16 %v163
    %v724 = vunpack.c.l.b16 %v164
    %v725 = vunpack.c.h.b16 %v164
    %v726 = vunpack.c.l.b16 %v165
    %v727 = vunpack.c.h.b16 %v165
    %v728 = vunpack.c.l.b16 %v166
    %v729 = vunpack.c.h.b16 %v166
    %v730 = vunpack.c.l.b16 %v167
    %v731 = vunpack.c.h.b16 %v167
    %v732 = vunpack.c.l.b16 %v168
    %v733 = vunpack.c.h.b16 %v168
    %v734 = vunpack.c.l.b16 %v169
    %v735 = vunpack.c.h.b16 %v169
    %v736 = vunpack.c.l.b16 %v170
    %v737 = vunpack.c.h.b16 %v170
    %v738 = vunpack.c.l.b16 %v171
    %v739 = vunpack.c.h.b16 %v171
    %v740 = vunpack.c.l.b16 %v172
    %v741 = vunpack.c.h.b16 %v172
    %v742 = vunpack.c.l.b16 %v173
    %v743 = vunpack.c.h.b16 %v173
    %v744 = vunpack.c.l.b16 %v174
    %v745 = vunpack.c.h.b16 %v174
    %v746 = vunpack.c.l.b16 %v175
    %v747 = vunpack.c.h.b16 %v175
    %v748 = vunpack.c.l.b16 %v176
    %v749 = vunpack.c.h.b16 %v176
    %v750 = vunpack.c.l.b16 %v177
    %v751 = vunpack.c.h.b16 %v177
    %v752 = vunpack.c.l.b16 %v178
    %v753 = vunpack.c.h.b16 %v178
    %v754 = vunpack.c.l.b16 %v179
    %v755 = vunpack.c.h.b16 %v179
    %v756 = vunpack.c.l.b16 %v180
    %v757 = vunpack.c.h.b16 %v180
    %v758 = vunpack.c.l.b16 %v181
    %v759 = vunpack.c.h.b16 %v181
    %v760 = vunpack.c.l.b16 %v182
    %v761 = vunpack.c.h.b16 %v182
    %v762 = vunpack.c.l.b16 %v183
    %v763 = vunpack.c.h.b16 %v183
    %v764 = vunpack.c.l.b16 %v184
    %v765 = vunpack.c.h.b16 %v184
    %v766 = vunpack.c.l.b16 %v185
    %v767 = vunpack.c.h.b16 %v185
    %v768 = vunpack.c.l.b16 %v186
    %v769 = vunpack.c.h.b16 %v186
    %v770 = vunpack.c.l.b16 %v187
    %v771 = vunpack.c.h.b16 %v187
    %v772 = vunpack.c.l.b16 %v188
    %v773 = vunpack.c.h.b16 %v188
    %v774 = vunpack.c.l.b16 %v189
    %v775 = vunpack.c.h.b16 %v189
    %v776 = vunpack.c.l.b16 %v190
    %v777 = vunpack.c.h.b16 %v190
    %v778 = vunpack.c.l.b16 %v191
    %v779 = vunpack.c.h.b16 %v191
    %v780 = vunpack.c.l.b16 %v192
    %v781 = vunpack.c.h.b16 %v192
    %v782 = vunpack.c.l.b16 %v193
    %v783 = vunpack.c.h.b16 %v193
    %v784 = vunpack.c.l.b16 %v194
    %v785 = vunpack.c.h.b16 %v194
    %v786 = vunpack.c.l.b16 %v195
    %v787 = vunpack.c.h.b16 %v195
    %v788 = vunpack.c.l.b16 %v196
    %v789 = vunpack.c.h.b16 %v196
    %v790 = vunpack.c.l.b16 %v197
    %v791 = vunpack.c.h.b16 %v197
    %v792 = vunpack.c.l.b16 %v198
    %v793 = vunpack.c.h.b16 %v198
    %v794 = vunpack.c.l.b16 %v199
    %v795 = vunpack.c.h.b16 %v199
    %v796 = vunpack.c.l.b16 %v200
    %v797 = vunpack.c.h.b16 %v200
    %v798 = vunpack.c.l.b16 %v201
    %v799 = vunpack.c.h.b16 %v201
    %v800 = vunpack.c.l.b16 %v202
    %v801 = vunpack.c.h.b16 %v202
    %v802 = vunpack.c.l.b16 %v203
    %v803 = vunpack.c.h.b16 %v203
    %v804 = vunpack.c.l.b16 %v204
    %v805 = vunpack.c.h.b16 %v204
    %v806 = vunpack.c.l.b16 %v205
    %v807 = vunpack.c.h.b16 %v205
    %v808 = vunpack.c.l.b16 %v206
    %v809 = vunpack.c.h.b16 %v206
    %v810 = vunpack.c.l.b16 %v207
    %v811 = vunpack.c.h.b16 %v207
    %v812 = vunpack.c.l.b16 %v208
    %v813 = vunpack.c.h.b16 %v208
    %v814 = vunpack.c.l.b16 %v209
    %v815 = vunpack.c.h.b16 %v209
    %v816 = vunpack.c.l.b16 %v210
    %v817 = vunpack.c.h.b16 %v210
    %v818 = vunpack.c.l.b16 %v211
    %v819 = vunpack.c.h.b16 %v211
    %v820 = vunpack.c.l.b16 %v212
    %v821 = vunpack.c.h.b16 %v212
    %v822 = vunpack.c.l.b16 %v213
    %v823 = vunpack.c.h.b16 %v213
    %v824 = vunpack.c.l.b16 %v214
    %v825 = vunpack.c.h.b16 %v214
    %v826 = vunpack.c.l.b16 %v215
    %v827 = vunpack.c.h.b16 %v215
    %v828 = vunpack.c.l.b16 %v216
    %v829 = vunpack.c.h.b16 %v216
    %v830 = vunpack.c.l.b16 %v217
    %v831 = vunpack.c.h.b16 %v217
    %v832 = vunpack.c.l.b16 %v218
    %v833 = vunpack.c.h.b16 %v218
    %v834 = vunpack.c.l.b16 %v219
    %v835 = vunpack.c.h.b16 %v219
    %v836 = vunpack.c.l.b16 %v220
    %v837 = vunpack.c.h.b16 %v220
    %v838 = vunpack.c.l.b16 %v221
    %v839 = vunpack.c.h.b16 %v221
    %v840 = vunpack.c.l.b16 %v222
    %v841 = vunpack.c.h.b16 %v222
    %v842 = vunpack.c.l.b16 %v223
    %v843 = vunpack.c.h.b16 %v223
    %v844 = vunpack.c.l.b16 %v224
    %v845 = vunpack.c.h.b16 %v224
    %v846 = vunpack.c.l.b16 %v225
    %v847 = vunpack.c.h.b16 %v225
    %v848 = vunpack.c.l.b16 %v226
    %v849 = vunpack.c.h.b16 %v226
    %v850 = vunpack.c.l.b16 %v227
    %v851 = vunpack.c.h.b16 %v227
    %v852 = vunpack.c.l.b16 %v228
    %v853 = vunpack.c.h.b16 %v228
    %v854 = vunpack.c.l.b16 %v229
    %v855 = vunpack.c.h.b16 %v229
    %v856 = vunpack.c.l.b16 %v230
    %v857 = vunpack.c.h.b16 %v230
    %v858 = vunpack.c.l.b16 %v231
    %v859 = vunpack.c.h.b16 %v231
    %v860 = vunpack.c.l.b16 %v232
    %v861 = vunpack.c.h.b16 %v232
    %v862 = vunpack.c.l.b16 %v233
    %v863 = vunpack.c.h.b16 %v233
    %v864 = vunpack.c.l.b16 %v234
    %v865 = vunpack.c.h.b16 %v234
    %v866 = vunpack.c.l.b16 %v235
    %v867 = vunpack.c.h.b16 %v235
    %v868 = vunpack.c.l.b16 %v236
    %v869 = vunpack.c.h.b16 %v236
    %v870 = vunpack.c.l.b16 %v237
    %v871 = vunpack.c.h.b16 %v237
    %v872 = vunpack.c.l.b16 %v238
    %v873 = vunpack.c.h.b16 %v238
    %v874 = vunpack.c.l.b16 %v239
    %v875 = vunpack.c.h.b16 %v239
    %v876 = vunpack.c.l.b16 %v240
    %v877 = vunpack.c.h.b16 %v240
    %v878 = vunpack.c.l.b16 %v241
    %v879 = vunpack.c.h.b16 %v241
    %v880 = vunpack.c.l.b16 %v242
    %v881 = vunpack.c.h.b16 %v242
    %v882 = vunpack.c.l.b16 %v243
    %v883 = vunpack.c.h.b16 %v243
    %v884 = vunpack.c.l.b16 %v244
    %v885 = vunpack.c.h.b16 %v244
    %v886 = vunpack.c.l.b16 %v245
    %v887 = vunpack.c.h.b16 %v245
    %v888 = vunpack.c.l.b16 %v246
    %v889 = vunpack.c.h.b16 %v246
    %v890 = vunpack.c.l.b16 %v247
    %v891 = vunpack.c.h.b16 %v247
    %v892 = vunpack.c.l.b16 %v248
    %v893 = vunpack.c.h.b16 %v248
    %v894 = vunpack.c.l.b16 %v249
    %v895 = vunpack.c.h.b16 %v249
    %v896 = vunpack.c.l.b16 %v250
    %v897 = vunpack.c.h.b16 %v250
    %v898 = vunpack.c.l.b16 %v251
    %v899 = vunpack.c.h.b16 %v251
    %v900 = vunpack.c.l.b16 %v252
    %v901 = vunpack.c.h.b16 %v252
    %v902 = vunpack.c.l.b16 %v253
    %v903 = vunpack.c.h.b16 %v253
    %v904 = vunpack.c.l.b16 %v254
    %v905 = vunpack.c.h.b16 %v254
    %v906 = vunpack.c.l.b16 %v255
    %v907 = vunpack.c.h.b16 %v255
    %v908 = vunpack.c.l.b16 %v256
    %v909 = vunpack.c.h.b16 %v256
    %v910 = vunpack.c.l.b16 %v257
    %v911 = vunpack.c.h.b16 %v257
    %v912 = vunpack.c.l.b16 %v258
    %v913 = vunpack.c.h.b16 %v258
    %v914 = vunpack.c.l.b16 %v259
    %v915 = vunpack.c.h.b16 %v259
    %v916 = vunpack.c.l.b16 %v260
    %v917 = vunpack.c.h.b16 %v260
    %v918 = vunpack.c.l.b16 %v261
    %v919 = vunpack.c.h.b16 %v261
    %v920 = vunpack.c.l.b16 %v262
    %v921 = vunpack.c.h.b16 %v262
    %v922 = vunpack.c.l.b16 %v263
    %v923 = vunpack.c.h.b16 %v263
    %v924 = vunpack.c.l.b16 %v264
    %v925 = vunpack.c.h.b16 %v264
    %v926 = vunpack.c.l.b16 %v265
    %v927 = vunpack.c.h.b16 %v265
    %v928 = vunpack.c.l.b16 %v266
    %v929 = vunpack.c.h.b16 %v266
    %v930 = vunpack.c.l.b16 %v267
    %v931 = vunpack.c.h.b16 %v267
    %v932 = vunpack.c.l.b16 %v268
    %v933 = vunpack.c.h.b16 %v268
    %v934 = vunpack.c.l.b16 %v269
    %v935 = vunpack.c.h.b16 %v269
    %v936 = vunpack.c.l.b16 %v270
    %v937 = vunpack.c.h.b16 %v270
    %v938 = vunpack.c.l.b16 %v271
    %v939 = vunpack.c.h.b16 %v271
    %v940 = vunpack.c.l.b16 %v272
    %v941 = vunpack.c.h.b16 %v272
    %v942 = vunpack.c.l.b16 %v273
    %v943 = vunpack.c.h.b16 %v273
    %v944 = vunpack.c.l.b16 %v274
    %v945 = vunpack.c.h.b16 %v274
    %v946 = vunpack.c.l.b16 %v275
    %v947 = vunpack.c.h.b16 %v275
    %v948 = vunpack.c.l.b16 %v276
    %v949 = vunpack.c.h.b16 %v276
    %v950 = vunpack.c.l.b16 %v277
    %v951 = vunpack.c.h.b16 %v277
    %v952 = vunpack.c.l.b16 %v278
    %v953 = vunpack.c.h.b16 %v278
    %v954 = vunpack.c.l.b16 %v279
    %v955 = vunpack.c.h.b16 %v279
    %v956 = vunpack.c.l.b16 %v280
    %v957 = vunpack.c.h.b16 %v280
    %v958 = vunpack.c.l.b16 %v281
    %v959 = vunpack.c.h.b16 %v281
    %v960 = vunpack.c.l.b16 %v282
    %v961 = vunpack.c.h.b16 %v282
    %v962 = vunpack.c.l.b16 %v283
    %v963 = vunpack.c.h.b16 %v283
    %v964 = vunpack.c.l.b16 %v284
    %v965 = vunpack.c.h.b16 %v284
    %v966 = vunpack.c.l.b16 %v285
    %v967 = vunpack.c.h.b16 %v285
    %v968 = vunpack.c.l.b16 %v286
    %v969 = vunpack.c.h.b16 %v286
    %v970 = vunpack.c.l.b16 %v287
    %v971 = vunpack.c.h.b16 %v287
    %v972 = vunpack.c.l.b16 %v288
    %v973 = vunpack.c.h.b16 %v288
    %v974 = vunpack.c.l.b16 %v289
    %v975 = vunpack.c.h.b16 %v289
    %v976 = vunpack.c.l.b16 %v290
    %v977 = vunpack.c.h.b16 %v290
    %v978 = vunpack.c.l.b16 %v291
    %v979 = vunpack.c.h.b16 %v291
    %v980 = vunpack.c.l.b16 %v292
    %v981 = vunpack.c.h.b16 %v292
    %v982 = vunpack.c.l.b16 %v293
    %v983 = vunpack.c.h.b16 %v293
    %v984 = vunpack.c.l.b16 %v294
    %v985 = vunpack.c.h.b16 %v294
    %v986 = vunpack.c.l.b16 %v295
    %v987 = vunpack.c.h.b16 %v295
    %v988 = vunpack.c.l.b16 %v296
    %v989 = vunpack.c.h.b16 %v296
    %v990 = vunpack.c.l.b16 %v297
    %v991 = vunpack.c.h.b16 %v297
    %v992 = vunpack.c.l.b16 %v298
    %v993 = vunpack.c.h.b16 %v298
    %v994 = vunpack.c.l.b16 %v299
    %v995 = vunpack.c.h.b16 %v299
    %v996 = vunpack.c.l.b16 %v300
    %v997 = vunpack.c.h.b16 %v300
    %v998 = vunpack.c.l.b16 %v301
    %v999 = vunpack.c.h.b16 %v301
    %v1000 = vunpack.c.l.b16 %v302
    %v1001 = vunpack.c.h.b16 %v302
    %v1002 = vunpack.c.l.b16 %v303
    %v1003 = vunpack.c.h.b16 %v303
    %v1004 = vunpack.c.l.b16 %v304
    %v1005 = vunpack.c.h.b16 %v304
    %v1006 = vunpack.c.l.b16 %v305
    %v1007 = vunpack.c.h.b16 %v305
    %v1008 = vunpack.c.l.b16 %v306
    %v1009 = vunpack.c.h.b16 %v306
    %v1010 = vunpack.c.l.b16 %v307
    %v1011 = vunpack.c.h.b16 %v307
    %v1012 = vunpack.c.l.b16 %v308
    %v1013 = vunpack.c.h.b16 %v308
    %v1014 = vunpack.c.l.b16 %v309
    %v1015 = vunpack.c.h.b16 %v309
    %v1016 = vunpack.c.l.b16 %v310
    %v1017 = vunpack.c.h.b16 %v310
    %v1018 = vunpack.c.l.b16 %v311
    %v1019 = vunpack.c.h.b16 %v311
    %v1020 = vunpack.c.l.b16 %v312
    %v1021 = vunpack.c.h.b16 %v312
    %v1022 = vunpack.c.l.b16 %v313
    %v1023 = vunpack.c.h.b16 %v313
    %v1024 = vunpack.c.l.b16 %v314
    %v1025 = vunpack.c.h.b16 %v314
    %v1026 = vunpack.c.l.b16 %v315
    %v1027 = vunpack.c.h.b16 %v315
    %v1028 = vunpack.c.l.b16 %v316
    %v1029 = vunpack.c.h.b16 %v316
    %v1030 = vunpack.c.l.b16 %v317
    %v1031 = vunpack.c.h.b16 %v317
    %v1032 = vunpack.c.l.b16 %v318
    %v1033 = vunpack.c.h.b16 %v318
    %v1034 = vunpack.c.l.b16 %v319
    %v1035 = vunpack.c.h.b16 %v319
    %v1036 = vunpack.c.l.b16 %v320
    %v1037 = vunpack.c.h.b16 %v320
    %v1038 = vunpack.c.l.b16 %v321
    %v1039 = vunpack.c.h.b16 %v321
    %v1040 = vunpack.c.l.b16 %v322
    %v1041 = vunpack.c.h.b16 %v322
    %v1042 = vunpack.c.l.b16 %v323
    %v1043 = vunpack.c.h.b16 %v323
    %v1044 = vunpack.c.l.b16 %v324
    %v1045 = vunpack.c.h.b16 %v324
    %v1046 = vunpack.c.l.b16 %v325
    %v1047 = vunpack.c.h.b16 %v325
    %v1048 = vunpack.c.l.b16 %v326
    %v1049 = vunpack.c.h.b16 %v326
    %v1050 = vunpack.c.l.b16 %v327
    %v1051 = vunpack.c.h.b16 %v327
    %v1052 = vunpack.c.l.b16 %v328
    %v1053 = vunpack.c.h.b16 %v328
    %v1054 = vunpack.c.l.b16 %v329
    %v1055 = vunpack.c.h.b16 %v329
    %v1056 = vunpack.c.l.b16 %v330
    %v1057 = vunpack.c.h.b16 %v330
    %v1058 = vunpack.c.l.b16 %v331
    %v1059 = vunpack.c.h.b16 %v331
    %v1060 = vunpack.c.l.b16 %v332
    %v1061 = vunpack.c.h.b16 %v332
    %v1062 = vunpack.c.l.b16 %v333
    %v1063 = vunpack.c.h.b16 %v333
    %v1064 = vunpack.c.l.b16 %v334
    %v1065 = vunpack.c.h.b16 %v334
    %v1066 = vunpack.c.l.b16 %v335
    %v1067 = vunpack.c.h.b16 %v335
    %v1068 = vunpack.c.l.b16 %v336
    %v1069 = vunpack.c.h.b16 %v336
    %v1070 = vunpack.c.l.b16 %v337
    %v1071 = vunpack.c.h.b16 %v337
    %v1072 = vunpack.c.l.b16 %v338
    %v1073 = vunpack.c.h.b16 %v338
    %v1074 = vunpack.c.l.b16 %v339
    %v1075 = vunpack.c.h.b16 %v339
    %v1076 = vunpack.c.l.b16 %v340
    %v1077 = vunpack.c.h.b16 %v340
    %v1078 = vunpack.c.l.b16 %v341
    %v1079 = vunpack.c.h.b16 %v341
    %v1080 = vunpack.c.l.b16 %v342
    %v1081 = vunpack.c.h.b16 %v342
    %v1082 = vunpack.c.l.b16 %v343
    %v1083 = vunpack.c.h.b16 %v343
    %v1084 = vunpack.c.l.b16 %v344
    %v1085 = vunpack.c.h.b16 %v344
    %v1086 = vunpack.c.l.b16 %v345
    %v1087 = vunpack.c.h.b16 %v345
    %v1088 = vunpack.c.l.b16 %v346
    %v1089 = vunpack.c.h.b16 %v346
    %v1090 = vunpack.c.l.b16 %v347
    %v1091 = vunpack.c.h.b16 %v347
    %v1092 = vunpack.c.l.b16 %v348
    %v1093 = vunpack.c.h.b16 %v348
    %v1094 = vunpack.c.l.b16 %v349
    %v1095 = vunpack.c.h.b16 %v349
    %v1096 = vunpack.c.l.b16 %v350
    %v1097 = vunpack.c.h.b16 %v350
    %v1098 = vunpack.c.l.b16 %v351
    %v1099 = vunpack.c.h.b16 %v351
    %v1100 = vunpack.c.l.b16 %v352
    %v1101 = vunpack.c.h.b16 %v352
    %v1102 = vunpack.c.l.b16 %v353
    %v1103 = vunpack.c.h.b16 %v353
    %v1104 = vunpack.c.l.b16 %v354
    %v1105 = vunpack.c.h.b16 %v354
    %v1106 = vunpack.c.l.b16 %v355
    %v1107 = vunpack.c.h.b16 %v355
    %v1108 = vunpack.c.l.b16 %v356
    %v1109 = vunpack.c.h.b16 %v356
    %v1110 = vunpack.c.l.b16 %v357
    %v1111 = vunpack.c.h.b16 %v357
    %v1112 = vunpack.c.l.b16 %v358
    %v1113 = vunpack.c.h.b16 %v358
    %v1114 = vunpack.c.l.b16 %v359
    %v1115 = vunpack.c.h.b16 %v359
    %v1116 = vunpack.c.l.b16 %v360
    %v1117 = vunpack.c.h.b16 %v360
    %v1118 = vunpack.c.l.b16 %v361
    %v1119 = vunpack.c.h.b16 %v361
    %v1120 = vunpack.c.l.b16 %v362
    %v1121 = vunpack.c.h.b16 %v362
    %v1122 = vunpack.c.l.b16 %v363
    %v1123 = vunpack.c.h.b16 %v363
    %v1124 = vunpack.c.l.b16 %v364
    %v1125 = vunpack.c.h.b16 %v364
    %v1126 = vunpack.c.l.b16 %v365
    %v1127 = vunpack.c.h.b16 %v365
    %v1128 = vunpack.c.l.b16 %v366
    %v1129 = vunpack.c.h.b16 %v366
    %v1130 = vunpack.c.l.b16 %v367
    %v1131 = vunpack.c.h.b16 %v367
    %v1132 = vunpack.c.l.b16 %v368
    %v1133 = vunpack.c.h.b16 %v368
    %v1134 = vunpack.c.l.b16 %v369
    %v1135 = vunpack.c.h.b16 %v369
    %v1136 = vunpack.c.l.b16 %v370
    %v1137 = vunpack.c.h.b16 %v370
    %v1138 = vunpack.c.l.b16 %v371
    %v1139 = vunpack.c.h.b16 %v371
    %v1140 = vunpack.c.l.b16 %v372
    %v1141 = vunpack.c.h.b16 %v372
    %v1142 = vunpack.c.l.b16 %v373
    %v1143 = vunpack.c.h.b16 %v373
    %v1144 = vunpack.c.l.b16 %v374
    %v1145 = vunpack.c.h.b16 %v374
    %v1146 = vunpack.c.l.b16 %v375
    %v1147 = vunpack.c.h.b16 %v375
    %v1148 = vunpack.c.l.b16 %v376
    %v1149 = vunpack.c.h.b16 %v376
    %v1150 = vunpack.c.l.b16 %v377
    %v1151 = vunpack.c.h.b16 %v377
    %v1152 = vunpack.c.l.b16 %v378
    %v1153 = vunpack.c.h.b16 %v378
    %v1154 = vunpack.c.l.b16 %v379
    %v1155 = vunpack.c.h.b16 %v379
    %v1156 = vunpack.c.l.b16 %v380
    %v1157 = vunpack.c.h.b16 %v380
    %v1158 = vunpack.c.l.b16 %v381
    %v1159 = vunpack.c.h.b16 %v381
    %v1160 = vunpack.c.l.b16 %v382
    %v1161 = vunpack.c.h.b16 %v382
    %v1162 = vunpack.c.l.b16 %v383
    %v1163 = vunpack.c.h.b16 %v383
    %v1164 = vunpack.c.l.b16 %v384
    %v1165 = vunpack.c.h.b16 %v384
    %v1166 = vunpack.c.l.b16 %v385
    %v1167 = vunpack.c.h.b16 %v385
    %v1168 = vunpack.c.l.b16 %v386
    %v1169 = vunpack.c.h.b16 %v386
    %v1170 = vunpack.c.l.b16 %v387
    %v1171 = vunpack.c.h.b16 %v387
    %v1172 = vunpack.c.l.b16 %v388
    %v1173 = vunpack.c.h.b16 %v388
    %v1174 = vunpack.c.l.b16 %v389
    %v1175 = vunpack.c.h.b16 %v389
    %v1176 = vunpack.c.l.b16 %v390
    %v1177 = vunpack.c.h.b16 %v390
    %v1178 = vunpack.c.l.b16 %v391
    %v1179 = vunpack.c.h.b16 %v391
    %v1180 = vunpack.c.l.b16 %v392
    %v1181 = vunpack.c.h.b16 %v392
    %v1182 = vunpack.c.l.b16 %v393
    %v1183 = vunpack.c.h.b16 %v393
    %v1184 = vpack.c.b16 %v676, %v672
    %v1185 = vpack.c.b16 %v677, %v673
    %v1186 = vpack.c.b16 %v678, %v674
    %v1187 = vpack.c.b16 %v679, %v675
    %v1188 = vpack.c.b16 %v684, %v680
    %v1189 = vpack.c.b16 %v685, %v681
    %v1190 = vpack.c.b16 %v686, %v682
    %v1191 = vpack.c.b16 %v687, %v683
    %v1192 = vpack.c.b16 %v692, %v688
    %v1193 = vpack.c.b16 %v693, %v689
    %v1194 = vpack.c.b16 %v694, %v690
    %v1195 = vpack.c.b16 %v695, %v691
    %v1196 = vpack.c.b16 %v700, %v696
    %v1197 = vpack.c.b16 %v701, %v697
    %v1198 = vpack.c.b16 %v702, %v698
    %v1199 = vpack.c.b16 %v703, %v699
    %v1200 = vpack.c.b16 %v708, %v704
    %v1201 = vpack.c.b16 %v709, %v705
    %v1202 = vpack.c.b16 %v710, %v706
    %v1203 = vpack.c.b16 %v711, %v707
    %v1204 = vpack.c.b16 %v716, %v712
    %v1205 = vpack.c.b16 %v717, %v713
    %v1206 = vpack.c.b16 %v718, %v714
    %v1207 = vpack.c.b16 %v719, %v715
    %v1208 = vpack.c.b16 %v724, %v720
    %v1209 = vpack.c.b16 %v725, %v721
    %v1210 = vpack.c.b16 %v726, %v722
    %v1211 = vpack.c.b16 %v727, %v723
    %v1212 = vpack.c.b16 %v732, %v728
    %v1213 = vpack.c.b16 %v733, %v729
    %v1214 = vpack.c.b16 %v734, %v730
    %v1215 = vpack.c.b16 %v735, %v731
    %v1216 = vpack.c.b16 %v740, %v736
    %v1217 = vpack.c.b16 %v741, %v737
    %v1218 = vpack.c.b16 %v742, %v738
    %v1219 = vpack.c.b16 %v743, %v739
    %v1220 = vpack.c.b16 %v748, %v744
    %v1221 = vpack.c.b16 %v749, %v745
    %v1222 = vpack.c.b16 %v750, %v746
    %v1223 = vpack.c.b16 %v751, %v747
    %v1224 = vpack.c.b16 %v756, %v752
    %v1225 = vpack.c.b16 %v757, %v753
    %v1226 = vpack.c.b16 %v758, %v754
    %v1227 = vpack.c.b16 %v759, %v755
    %v1228 = vpack.c.b16 %v764, %v760
    %v1229 = vpack.c.b16 %v765, %v761
    %v1230 = vpack.c.b16 %v766, %v762
    %v1231 = vpack.c.b16 %v767, %v763
    %v1232 = vpack.c.b16 %v772, %v768
    %v1233 = vpack.c.b16 %v773, %v769
    %v1234 = vpack.c.b16 %v774, %v770
    %v1235 = vpack.c.b16 %v775, %v771
    %v1236 = vpack.c.b16 %v780, %v776
    %v1237 = vpack.c.b16 %v781, %v777
    %v1238 = vpack.c.b16 %v782, %v778
    %v1239 = vpack.c.b16 %v783, %v779
    %v1240 = vpack.c.b16 %v788, %v784
    %v1241 = vpack.c.b16 %v789, %v785
    %v1242 = vpack.c.b16 %v790, %v786
    %v1243 = vpack.c.b16 %v791, %v787
    %v1244 = vpack.c.b16 %v796, %v792
    %v1245 = vpack.c.b16 %v797, %v793
    %v1246 = vpack.c.b16 %v798, %v794
    %v1247 = vpack.c.b16 %v799, %v795
    %v1248 = vpack.c.b16 %v804, %v800
    %v1249 = vpack.c.b16 %v805, %v801
    %v1250 = vpack.c.b16 %v806, %v802
    %v1251 = vpack.c.b16 %v807, %v803
    %v1252 = vpack.c.b16 %v812, %v808
    %v1253 = vpack.c.b16 %v813, %v809
    %v1254 = vpack.c.b16 %v814, %v810
    %v1255 = vpack.c.b16 %v815, %v811
    %v1256 = vpack.c.b16 %v820, %v816
    %v1257 = vpack.c.b16 %v821, %v817
    %v1258 = vpack.c.b16 %v822, %v818
    %v1259 = vpack.c.b16 %v823, %v819
    %v1260 = vpack.c.b16 %v828, %v824
    %v1261 = vpack.c.b16 %v829, %v825
    %v1262 = vpack.c.b16 %v830, %v826
    %v1263 = vpack.c.b16 %v831, %v827
    %v1264 = vpack.c.b16 %v836, %v832
    %v1265 = vpack.c.b16 %v837, %v833
    %v1266 = vpack.c.b16 %v838, %v834
    %v1267 = vpack.c.b16 %v839, %v835
    %v1268 = vpack.c.b16 %v844, %v840
    %v1269 = vpack.c.b16 %v845, %v841
    %v1270 = vpack.c.b16 %v846, %v842
    %v1271 = vpack.c.b16 %v847, %v843
    %v1272 = vpack.c.b16 %v852, %v848
    %v1273 = vpack.c.b16 %v853, %v849
    %v1274 = vpack.c.b16 %v854, %v850
    %v1275 = vpack.c.b16 %v855, %v851
    %v1276 = vpack.c.b16 %v860, %v856
    %v1277 = vpack.c.b16 %v861, %v857
    %v1278 = vpack.c.b16 %v862, %v858
    %v1279 = vpack.c.b16 %v863, %v859
    %v1280 = vpack.c.b16 %v868, %v864
    %v1281 = vpack.c.b16 %v869, %v865
    %v1282 = vpack.c.b16 %v870, %v866
    %v1283 = vpack.c.b16 %v871, %v867
    %v1284 = vpack.c.b16 %v876, %v872
    %v1285 = vpack.c.b16 %v877, %v873
    %v1286 = vpack.c.b16 %v878, %v874
    %v1287 = vpack.c.b16 %v879, %v875
    %v1288 = vpack.c.b16 %v884, %v880
    %v1289 = vpack.c.b16 %v885, %v881
    %v1290 = vpack.c.b16 %v886, %v882
    %v1291 = vpack.c.b16 %v887, %v883
    %v1292 = vpack.c.b16 %v892, %v888
    %v1293 = vpack.c.b16 %v893, %v889
    %v1294 = vpack.c.b16 %v894, %v890
    %v1295 = vpack.c.b16 %v895, %v891
    %v1296 = vpack.c.b16 %v900, %v896
    %v1297 = vpack.c.b16 %v901, %v897
    %v1298 = vpack.c.b16 %v902, %v898
    %v1299 = vpack.c.b16 %v903, %v899
    %v1300 = vpack.c.b16 %v908, %v904
    %v1301 = vpack.c.b16 %v909, %v905
    %v1302 = vpack.c.b16 %v910, %v906
    %v1303 = vpack.c.b16 %v911, %v907
    %v1304 = vpack.c.b16 %v916, %v912
    %v1305 = vpack.c.b16 %v917, %v913
    %v1306 = vpack.c.b16 %v918, %v914
    %v1307 = vpack.c.b16 %v919, %v915
    %v1308 = vpack.c.b16 %v924, %v920
    %v1309 = vpack.c.b16 %v925, %v921
    %v1310 = vpack.c.b16 %v926, %v922
    %v1311 = vpack.c.b16 %v927, %v923
    %v1312 = vpack.c.b16 %v932, %v928
    %v1313 = vpack.c.b16 %v933, %v929
    %v1314 = vpack.c.b16 %v934, %v930
    %v1315 = vpack.c.b16 %v935, %v931
    %v1316 = vpack.c.b16 %v940, %v936
    %v1317 = vpack.c.b16 %v941, %v937
    %v1318 = vpack.c.b16 %v942, %v938
    %v1319 = vpack.c.b16 %v943, %v939
    %v1320 = vpack.c.b16 %v948, %v944
    %v1321 = vpack.c.b16 %v949, %v945
    %v1322 = vpack.c.b16 %v950, %v946
    %v1323 = vpack.c.b16 %v951, %v947
    %v1324 = vpack.c.b16 %v956, %v952
    %v1325 = vpack.c.b16 %v957, %v953
    %v1326 = vpack.c.b16 %v958, %v954
    %v1327 = vpack.c.b16 %v959, %v955
    %v1328 = vpack.c.b16 %v964, %v960
    %v1329 = vpack.c.b16 %v965, %v961
    %v1330 = vpack.c.b16 %v966, %v962
    %v1331 = vpack.c.b16 %v967, %v963
    %v1332 = vpack.c.b16 %v972, %v968
    %v1333 = vpack.c.b16 %v973, %v969
    %v1334 = vpack.c.b16 %v974, %v970
    %v1335 = vpack.c.b16 %v975, %v971
    %v1336 = vpack.c.b16 %v980, %v976
    %v1337 = vpack.c.b16 %v981, %v977
    %v1338 = vpack.c.b16 %v982, %v978
    %v1339 = vpack.c.b16 %v983, %v979
    %v1340 = vpack.c.b16 %v988, %v984
    %v1341 = vpack.c.b16 %v989, %v985
    %v1342 = vpack.c.b16 %v990, %v986
    %v1343 = vpack.c.b16 %v991, %v987
    %v1344 = vpack.c.b16 %v996, %v992
    %v1345 = vpack.c.b16 %v997, %v993
    %v1346 = vpack.c.b16 %v998, %v994
    %v1347 = vpack.c.b16 %v999, %v995
    %v1348 = vpack.c.b16 %v1004, %v1000
    %v1349 = vpack.c.b16 %v1005, %v1001
    %v1350 = vpack.c.b16 %v1006, %v1002
    %v1351 = vpack.c.b16 %v1007, %v1003
    %v1352 = vpack.c.b16 %v1012, %v1008
    %v1353 = vpack.c.b16 %v1013, %v1009
    %v1354 = vpack.c.b16 %v1014, %v1010
    %v1355 = vpack.c.b16 %v1015, %v1011
    %v1356 = vpack.c.b16 %v1020, %v1016
    %v1357 = vpack.c.b16 %v1021, %v1017
    %v1358 = vpack.c.b16 %v1022, %v1018
    %v1359 = vpack.c.b16 %v1023, %v1019
    %v1360 = vpack.c.b16 %v1028, %v1024
    %v1361 = vpack.c.b16 %v1029, %v1025
    %v1362 = vpack.c.b16 %v1030, %v1026
    %v1363 = vpack.c.b16 %v1031, %v1027
    %v1364 = vpack.c.b16 %v1036, %v1032
    %v1365 = vpack.c.b16 %v1037, %v1033
    %v1366 = vpack.c.b16 %v1038, %v1034
    %v1367 = vpack.c.b16 %v1039, %v1035
    %v1368 = vpack.c.b16 %v1044, %v1040
    %v1369 = vpack.c.b16 %v1045, %v1041
    %v1370 = vpack.c.b16 %v1046, %v1042
    %v1371 = vpack.c.b16 %v1047, %v1043
    %v1372 = vpack.c.b16 %v1052, %v1048
    %v1373 = vpack.c.b16 %v1053, %v1049
    %v1374 = vpack.c.b16 %v1054, %v1050
    %v1375 = vpack.c.b16 %v1055, %v1051
    %v1376 = vpack.c.b16 %v1060, %v1056
    %v1377 = vpack.c.b16 %v1061, %v1057
    %v1378 = vpack.c.b16 %v1062, %v1058
    %v1379 = vpack.c.b16 %v1063, %v1059
    %v1380 = vpack.c.b16 %v1068, %v1064
    %v1381 = vpack.c.b16 %v1069, %v1065
    %v1382 = vpack.c.b16 %v1070, %v1066
    %v1383 = vpack.c.b16 %v1071, %v1067
    %v1384 = vpack.c.b16 %v1076, %v1072
    %v1385 = vpack.c.b16 %v1077, %v1073
    %v1386 = vpack.c.b16 %v1078, %v1074
    %v1387 = vpack.c.b16 %v1079, %v1075
    %v1388 = vpack.c.b16 %v1084, %v1080
    %v1389 = vpack.c.b16 %v1085, %v1081
    %v1390 = vpack.c.b16 %v1086, %v1082
    %v1391 = vpack.c.b16 %v1087, %v1083
    %v1392 = vpack.c.b16 %v1092, %v1088
    %v1393 = vpack.c.b16 %v1093, %v1089
    %v1394 = vpack.c.b16 %v1094, %v1090
    %v1395 = vpack.c.b16 %v1095, %v1091
    %v1396 = vpack.c.b16 %v1100, %v1096
    %v1397 = vpack.c.b16 %v1101, %v1097
    %v1398 = vpack.c.b16 %v1102, %v1098
    %v1399 = vpack.c.b16 %v1103, %v1099
    %v1400 = vpack.c.b16 %v1108, %v1104
    %v1401 = vpack.c.b16 %v1109, %v1105
    %v1402 = vpack.c.b16 %v1110, %v1106
    %v1403 = vpack.c.b16 %v1111, %v1107
    %v1404 = vpack.c.b16 %v1116, %v1112
    %v1405 = vpack.c.b16 %v1117, %v1113
    %v1406 = vpack.c.b16 %v1118, %v1114
    %v1407 = vpack.c.b16 %v1119, %v1115
    %v1408 = vpack.c.b16 %v1124, %v1120
    %v1409 = vpack.c.b16 %v1125, %v1121
    %v1410 = vpack.c.b16 %v1126, %v1122
    %v1411 = vpack.c.b16 %v1127, %v1123
    %v1412 = vpack.c.b16 %v1132, %v1128
    %v1413 = vpack.c.b16 %v1133, %v1129
    %v1414 = vpack.c.b16 %v1134, %v1130
    %v1415 = vpack.c.b16 %v1135, %v1131
    %v1416 = vpack.c.b16 %v1140, %v1136
    %v1417 = vpack.c.b16 %v1141, %v1137
    %v1418 = vpack.c.b16 %v1142, %v1138
    %v1419 = vpack.c.b16 %v1143, %v1139
    %v1420 = vpack.c.b16 %v1148, %v1144
    %v1421 = vpack.c.b16 %v1149, %v1145
    %v1422 = vpack.c.b16 %v1150, %v1146
    %v1423 = vpack.c.b16 %v1151, %v1147
    %v1424 = vpack.c.b16 %v1156, %v1152
    %v1425 = vpack.c.b16 %v1157, %v1153
    %v1426 = vpack.c.b16 %v1158, %v1154
    %v1427 = vpack.c.b16 %v1159, %v1155
    %v1428 = vpack.c.b16 %v1164, %v1160
    %v1429 = vpack.c.b16 %v1165, %v1161
    %v1430 = vpack.c.b16 %v1166, %v1162
    %v1431 = vpack.c.b16 %v1167, %v1163
    %v1432 = vpack.c.b16 %v1172, %v1168
    %v1433 = vpack.c.b16 %v1173, %v1169
    %v1434 = vpack.c.b16 %v1174, %v1170
    %v1435 = vpack.c.b16 %v1175, %v1171
    %v1436 = vpack.c.b16 %v1180, %v1176
    %v1437 = vpack.c.b16 %v1181, %v1177
    %v1438 = vpack.c.b16 %v1182, %v1178
    %v1439 = vpack.c.b16 %v1183, %v1179
    %1696 = vmatprep.subr.bf16.mxu0 %v1213
    %1697 = vmatpush1.bf16.msra.mxu0 %v1212
    %1698 = vmatprep.subr.bf16.mxu0 %v1209
    %1699 = vmatpush1.bf16.msra.mxu0 %v1208
    %1700 = vmatprep.subr.bf16.mxu0 %v1205
    %1701 = vmatpush1.bf16.msra.mxu0 %v1204
    %1702 = vmatprep.subr.bf16.mxu0 %v1201
    %1703 = vmatpush1.bf16.msra.mxu0 %v1200
    %1704 = vmatprep.subr.bf16.mxu0 %v1197
    %1705 = vmatpush1.bf16.msra.mxu0 %v1196
    %1706 = vmatprep.subr.bf16.mxu0 %v1193
    %1707 = vmatpush1.bf16.msra.mxu0 %v1192
    %1708 = vmatprep.subr.bf16.mxu0 %v1189
    %1709 = vmatpush1.bf16.msra.mxu0 %v1188
    %1710 = vmatprep.subr.bf16.mxu0 %v1185
    %1711 = vmatpush1.bf16.msra.mxu0 %v1184
    %1712 = vmatprep.subr.bf16.mxu0 %v1245
    %1713 = vmatpush2.bf16.msra.mxu0 %v1244
    %1714 = vmatprep.subr.bf16.mxu0 %v1241
    %1715 = vmatpush2.bf16.msra.mxu0 %v1240
    %1716 = vmatprep.subr.bf16.mxu0 %v1237
    %1717 = vmatpush2.bf16.msra.mxu0 %v1236
    %1718 = vmatprep.subr.bf16.mxu0 %v1233
    %1719 = vmatpush2.bf16.msra.mxu0 %v1232
    %1720 = vmatprep.subr.bf16.mxu0 %v1229
    %1721 = vmatpush2.bf16.msra.mxu0 %v1228
    %1722 = vmatprep.subr.bf16.mxu0 %v1225
    %1723 = vmatpush2.bf16.msra.mxu0 %v1224
    %1724 = vmatprep.subr.bf16.mxu0 %v1221
    %1725 = vmatpush2.bf16.msra.mxu0 %v1220
    %1726 = vmatprep.subr.bf16.mxu0 %v1217
    %1727 = vmatpush2.bf16.msra.mxu0 %v1216
    %1728 = vmatprep.mubr.bf16.mxu0 %v131
    %1729 = vmatmul.mubr.bf16.gmra.mxu0 %v130
    %v1730 = vpop.f32.mrf.mxu0
    %v1731 = vadd.f32 %v399, %v1730
    %v1732 = vpop.f32.mrf.mxu0
    %v1733 = vadd.f32 %v403, %v1732
    %v1734 = vpop.f32.mrf.mxu0
    %v1735 = vadd.f32 %v399, %v1734
    %v1736 = vpop.f32.mrf.mxu0
    %v1737 = vadd.f32 %v403, %v1736
    %1738 = vdwg.mxu0
    %1739 = vmatprep.subr.bf16.mxu0 %v1277
    %1740 = vmatpush1.bf16.msra.mxu0 %v1276
    %1741 = vmatprep.subr.bf16.mxu0 %v1273
    %1742 = vmatpush1.bf16.msra.mxu0 %v1272
    %1743 = vmatprep.subr.bf16.mxu0 %v1269
    %1744 = vmatpush1.bf16.msra.mxu0 %v1268
    %1745 = vmatprep.subr.bf16.mxu0 %v1265
    %1746 = vmatpush1.bf16.msra.mxu0 %v1264
    %1747 = vmatprep.subr.bf16.mxu0 %v1261
    %1748 = vmatpush1.bf16.msra.mxu0 %v1260
    %1749 = vmatprep.subr.bf16.mxu0 %v1257
    %1750 = vmatpush1.bf16.msra.mxu0 %v1256
    %1751 = vmatprep.subr.bf16.mxu0 %v1253
    %1752 = vmatpush1.bf16.msra.mxu0 %v1252
    %1753 = vmatprep.subr.bf16.mxu0 %v1249
    %1754 = vmatpush1.bf16.msra.mxu0 %v1248
    %1755 = vmatprep.subr.bf16.mxu0 %v1309
    %1756 = vmatpush2.bf16.msra.mxu0 %v1308
    %1757 = vmatprep.subr.bf16.mxu0 %v1305
    %1758 = vmatpush2.bf16.msra.mxu0 %v1304
    %1759 = vmatprep.subr.bf16.mxu0 %v1301
    %1760 = vmatpush2.bf16.msra.mxu0 %v1300
    %1761 = vmatprep.subr.bf16.mxu0 %v1297
    %1762 = vmatpush2.bf16.msra.mxu0 %v1296
    %1763 = vmatprep.subr.bf16.mxu0 %v1293
    %1764 = vmatpush2.bf16.msra.mxu0 %v1292
    %1765 = vmatprep.subr.bf16.mxu0 %v1289
    %1766 = vmatpush2.bf16.msra.mxu0 %v1288
    %1767 = vmatprep.subr.bf16.mxu0 %v1285
    %1768 = vmatpush2.bf16.msra.mxu0 %v1284
    %1769 = vmatprep.subr.bf16.mxu0 %v1281
    %1770 = vmatpush2.bf16.msra.mxu0 %v1280
    %1771 = vmatprep.mubr.bf16.mxu0 %v133
    %1772 = vmatmul.mubr.bf16.gmra.mxu0 %v132
    %v1773 = vpop.f32.mrf.mxu0
    %v1774 = vadd.f32 %v1731, %v1773
    %v1775 = vpop.f32.mrf.mxu0
    %v1776 = vadd.f32 %v1733, %v1775
    %v1777 = vpop.f32.mrf.mxu0
    %v1778 = vadd.f32 %v1735, %v1777
    %v1779 = vpop.f32.mrf.mxu0
    %v1780 = vadd.f32 %v1737, %v1779
    %1781 = vdwg.mxu0
    %1782 = vmatprep.subr.bf16.mxu0 %v1341
    %1783 = vmatpush1.bf16.msra.mxu0 %v1340
    %1784 = vmatprep.subr.bf16.mxu0 %v1337
    %1785 = vmatpush1.bf16.msra.mxu0 %v1336
    %1786 = vmatprep.subr.bf16.mxu0 %v1333
    %1787 = vmatpush1.bf16.msra.mxu0 %v1332
    %1788 = vmatprep.subr.bf16.mxu0 %v1329
    %1789 = vmatpush1.bf16.msra.mxu0 %v1328
    %1790 = vmatprep.subr.bf16.mxu0 %v1325
    %1791 = vmatpush1.bf16.msra.mxu0 %v1324
    %1792 = vmatprep.subr.bf16.mxu0 %v1321
    %1793 = vmatpush1.bf16.msra.mxu0 %v1320
    %1794 = vmatprep.subr.bf16.mxu0 %v1317
    %1795 = vmatpush1.bf16.msra.mxu0 %v1316
    %1796 = vmatprep.subr.bf16.mxu0 %v1313
    %1797 = vmatpush1.bf16.msra.mxu0 %v1312
    %1798 = vmatprep.subr.bf16.mxu0 %v1373
    %1799 = vmatpush2.bf16.msra.mxu0 %v1372
    %1800 = vmatprep.subr.bf16.mxu0 %v1369
    %1801 = vmatpush2.bf16.msra.mxu0 %v1368
    %1802 = vmatprep.subr.bf16.mxu0 %v1365
    %1803 = vmatpush2.bf16.msra.mxu0 %v1364
    %1804 = vmatprep.subr.bf16.mxu0 %v1361
    %1805 = vmatpush2.bf16.msra.mxu0 %v1360
    %1806 = vmatprep.subr.bf16.mxu0 %v1357
    %1807 = vmatpush2.bf16.msra.mxu0 %v1356
    %1808 = vmatprep.subr.bf16.mxu0 %v1353
    %1809 = vmatpush2.bf16.msra.mxu0 %v1352
    %1810 = vmatprep.subr.bf16.mxu0 %v1349
    %1811 = vmatpush2.bf16.msra.mxu0 %v1348
    %1812 = vmatprep.subr.bf16.mxu0 %v1345
    %1813 = vmatpush2.bf16.msra.mxu0 %v1344
    %1814 = vmatprep.mubr.bf16.mxu0 %v135
    %1815 = vmatmul.mubr.bf16.gmra.mxu0 %v134
    %v1816 = vpop.f32.mrf.mxu0
    %v1817 = vadd.f32 %v1774, %v1816
    %v1818 = vpop.f32.mrf.mxu0
    %v1819 = vadd.f32 %v1776, %v1818
    %v1820 = vpop.f32.mrf.mxu0
    %v1821 = vadd.f32 %v1778, %v1820
    %v1822 = vpop.f32.mrf.mxu0
    %v1823 = vadd.f32 %v1780, %v1822
    %1824 = vdwg.mxu0
    %1825 = vmatprep.subr.bf16.mxu0 %v1405
    %1826 = vmatpush1.bf16.msra.mxu0 %v1404
    %1827 = vmatprep.subr.bf16.mxu0 %v1401
    %1828 = vmatpush1.bf16.msra.mxu0 %v1400
    %1829 = vmatprep.subr.bf16.mxu0 %v1397
    %1830 = vmatpush1.bf16.msra.mxu0 %v1396
    %1831 = vmatprep.subr.bf16.mxu0 %v1393
    %1832 = vmatpush1.bf16.msra.mxu0 %v1392
    %1833 = vmatprep.subr.bf16.mxu0 %v1389
    %1834 = vmatpush1.bf16.msra.mxu0 %v1388
    %1835 = vmatprep.subr.bf16.mxu0 %v1385
    %1836 = vmatpush1.bf16.msra.mxu0 %v1384
    %1837 = vmatprep.subr.bf16.mxu0 %v1381
    %1838 = vmatpush1.bf16.msra.mxu0 %v1380
    %1839 = vmatprep.subr.bf16.mxu0 %v1377
    %1840 = vmatpush1.bf16.msra.mxu0 %v1376
    %1841 = vmatprep.subr.bf16.mxu0 %v1437
    %1842 = vmatpush2.bf16.msra.mxu0 %v1436
    %1843 = vmatprep.subr.bf16.mxu0 %v1433
    %1844 = vmatpush2.bf16.msra.mxu0 %v1432
    %1845 = vmatprep.subr.bf16.mxu0 %v1429
    %1846 = vmatpush2.bf16.msra.mxu0 %v1428
    %1847 = vmatprep.subr.bf16.mxu0 %v1425
    %1848 = vmatpush2.bf16.msra.mxu0 %v1424
    %1849 = vmatprep.subr.bf16.mxu0 %v1421
    %1850 = vmatpush2.bf16.msra.mxu0 %v1420
    %1851 = vmatprep.subr.bf16.mxu0 %v1417
    %1852 = vmatpush2.bf16.msra.mxu0 %v1416
    %1853 = vmatprep.subr.bf16.mxu0 %v1413
    %1854 = vmatpush2.bf16.msra.mxu0 %v1412
    %1855 = vmatprep.subr.bf16.mxu0 %v1409
    %1856 = vmatpush2.bf16.msra.mxu0 %v1408
    %1857 = vmatprep.mubr.bf16.mxu0 %v137
    %1858 = vmatmul.mubr.bf16.gmra.mxu0 %v136
    %v1859 = vpop.f32.mrf.mxu0
    %v1860 = vadd.f32 %v1817, %v1859
    %v1861 = vpop.f32.mrf.mxu0
    %v1862 = vadd.f32 %v1819, %v1861
    %v1863 = vpop.f32.mrf.mxu0
    %v1864 = vadd.f32 %v1821, %v1863
    %v1865 = vpop.f32.mrf.mxu0
    %v1866 = vadd.f32 %v1823, %v1865
    %1867 = vdwg.mxu0
    %1868 = vmatprep.subr.bf16.mxu0 %v1215
    %1869 = vmatpush1.bf16.msra.mxu0 %v1214
    %1870 = vmatprep.subr.bf16.mxu0 %v1211
    %1871 = vmatpush1.bf16.msra.mxu0 %v1210
    %1872 = vmatprep.subr.bf16.mxu0 %v1207
    %1873 = vmatpush1.bf16.msra.mxu0 %v1206
    %1874 = vmatprep.subr.bf16.mxu0 %v1203
    %1875 = vmatpush1.bf16.msra.mxu0 %v1202
    %1876 = vmatprep.subr.bf16.mxu0 %v1199
    %1877 = vmatpush1.bf16.msra.mxu0 %v1198
    %1878 = vmatprep.subr.bf16.mxu0 %v1195
    %1879 = vmatpush1.bf16.msra.mxu0 %v1194
    %1880 = vmatprep.subr.bf16.mxu0 %v1191
    %1881 = vmatpush1.bf16.msra.mxu0 %v1190
    %1882 = vmatprep.subr.bf16.mxu0 %v1187
    %1883 = vmatpush1.bf16.msra.mxu0 %v1186
    %1884 = vmatprep.subr.bf16.mxu0 %v1247
    %1885 = vmatpush2.bf16.msra.mxu0 %v1246
    %1886 = vmatprep.subr.bf16.mxu0 %v1243
    %1887 = vmatpush2.bf16.msra.mxu0 %v1242
    %1888 = vmatprep.subr.bf16.mxu0 %v1239
    %1889 = vmatpush2.bf16.msra.mxu0 %v1238
    %1890 = vmatprep.subr.bf16.mxu0 %v1235
    %1891 = vmatpush2.bf16.msra.mxu0 %v1234
    %1892 = vmatprep.subr.bf16.mxu0 %v1231
    %1893 = vmatpush2.bf16.msra.mxu0 %v1230
    %1894 = vmatprep.subr.bf16.mxu0 %v1227
    %1895 = vmatpush2.bf16.msra.mxu0 %v1226
    %1896 = vmatprep.subr.bf16.mxu0 %v1223
    %1897 = vmatpush2.bf16.msra.mxu0 %v1222
    %1898 = vmatprep.subr.bf16.mxu0 %v1219
    %1899 = vmatpush2.bf16.msra.mxu0 %v1218
    %1900 = vmatprep.mubr.bf16.mxu0 %v131
    %1901 = vmatmul.mubr.bf16.gmra.mxu0 %v130
    %v1902 = vpop.f32.mrf.mxu0
    %v1903 = vadd.f32 %v407, %v1902
    %v1904 = vpop.f32.mrf.mxu0
    %v1905 = vadd.f32 %v411, %v1904
    %v1906 = vpop.f32.mrf.mxu0
    %v1907 = vadd.f32 %v407, %v1906
    %v1908 = vpop.f32.mrf.mxu0
    %v1909 = vadd.f32 %v411, %v1908
    %1910 = vdwg.mxu0
    %1911 = vmatprep.subr.bf16.mxu0 %v1279
    %1912 = vmatpush1.bf16.msra.mxu0 %v1278
    %1913 = vmatprep.subr.bf16.mxu0 %v1275
    %1914 = vmatpush1.bf16.msra.mxu0 %v1274
    %1915 = vmatprep.subr.bf16.mxu0 %v1271
    %1916 = vmatpush1.bf16.msra.mxu0 %v1270
    %1917 = vmatprep.subr.bf16.mxu0 %v1267
    %1918 = vmatpush1.bf16.msra.mxu0 %v1266
    %1919 = vmatprep.subr.bf16.mxu0 %v1263
    %1920 = vmatpush1.bf16.msra.mxu0 %v1262
    %1921 = vmatprep.subr.bf16.mxu0 %v1259
    %1922 = vmatpush1.bf16.msra.mxu0 %v1258
    %1923 = vmatprep.subr.bf16.mxu0 %v1255
    %1924 = vmatpush1.bf16.msra.mxu0 %v1254
    %1925 = vmatprep.subr.bf16.mxu0 %v1251
    %1926 = vmatpush1.bf16.msra.mxu0 %v1250
    %1927 = vmatprep.subr.bf16.mxu0 %v1311
    %1928 = vmatpush2.bf16.msra.mxu0 %v1310
    %1929 = vmatprep.subr.bf16.mxu0 %v1307
    %1930 = vmatpush2.bf16.msra.mxu0 %v1306
    %1931 = vmatprep.subr.bf16.mxu0 %v1303
    %1932 = vmatpush2.bf16.msra.mxu0 %v1302
    %1933 = vmatprep.subr.bf16.mxu0 %v1299
    %1934 = vmatpush2.bf16.msra.mxu0 %v1298
    %1935 = vmatprep.subr.bf16.mxu0 %v1295
    %1936 = vmatpush2.bf16.msra.mxu0 %v1294
    %1937 = vmatprep.subr.bf16.mxu0 %v1291
    %1938 = vmatpush2.bf16.msra.mxu0 %v1290
    %1939 = vmatprep.subr.bf16.mxu0 %v1287
    %1940 = vmatpush2.bf16.msra.mxu0 %v1286
    %1941 = vmatprep.subr.bf16.mxu0 %v1283
    %1942 = vmatpush2.bf16.msra.mxu0 %v1282
    %1943 = vmatprep.mubr.bf16.mxu0 %v133
    %1944 = vmatmul.mubr.bf16.gmra.mxu0 %v132
    %v1945 = vpop.f32.mrf.mxu0
    %v1946 = vadd.f32 %v1903, %v1945
    %v1947 = vpop.f32.mrf.mxu0
    %v1948 = vadd.f32 %v1905, %v1947
    %v1949 = vpop.f32.mrf.mxu0
    %v1950 = vadd.f32 %v1907, %v1949
    %v1951 = vpop.f32.mrf.mxu0
    %v1952 = vadd.f32 %v1909, %v1951
    %1953 = vdwg.mxu0
    %1954 = vmatprep.subr.bf16.mxu0 %v1343
    %1955 = vmatpush1.bf16.msra.mxu0 %v1342
    %1956 = vmatprep.subr.bf16.mxu0 %v1339
    %1957 = vmatpush1.bf16.msra.mxu0 %v1338
    %1958 = vmatprep.subr.bf16.mxu0 %v1335
    %1959 = vmatpush1.bf16.msra.mxu0 %v1334
    %1960 = vmatprep.subr.bf16.mxu0 %v1331
    %1961 = vmatpush1.bf16.msra.mxu0 %v1330
    %1962 = vmatprep.subr.bf16.mxu0 %v1327
    %1963 = vmatpush1.bf16.msra.mxu0 %v1326
    %1964 = vmatprep.subr.bf16.mxu0 %v1323
    %1965 = vmatpush1.bf16.msra.mxu0 %v1322
    %1966 = vmatprep.subr.bf16.mxu0 %v1319
    %1967 = vmatpush1.bf16.msra.mxu0 %v1318
    %1968 = vmatprep.subr.bf16.mxu0 %v1315
    %1969 = vmatpush1.bf16.msra.mxu0 %v1314
    %1970 = vmatprep.subr.bf16.mxu0 %v1375
    %1971 = vmatpush2.bf16.msra.mxu0 %v1374
    %1972 = vmatprep.subr.bf16.mxu0 %v1371
    %1973 = vmatpush2.bf16.msra.mxu0 %v1370
    %1974 = vmatprep.subr.bf16.mxu0 %v1367
    %1975 = vmatpush2.bf16.msra.mxu0 %v1366
    %1976 = vmatprep.subr.bf16.mxu0 %v1363
    %1977 = vmatpush2.bf16.msra.mxu0 %v1362
    %1978 = vmatprep.subr.bf16.mxu0 %v1359
    %1979 = vmatpush2.bf16.msra.mxu0 %v1358
    %1980 = vmatprep.subr.bf16.mxu0 %v1355
    %1981 = vmatpush2.bf16.msra.mxu0 %v1354
    %1982 = vmatprep.subr.bf16.mxu0 %v1351
    %1983 = vmatpush2.bf16.msra.mxu0 %v1350
    %1984 = vmatprep.subr.bf16.mxu0 %v1347
    %1985 = vmatpush2.bf16.msra.mxu0 %v1346
    %1986 = vmatprep.mubr.bf16.mxu0 %v135
    %1987 = vmatmul.mubr.bf16.gmra.mxu0 %v134
    %v1988 = vpop.f32.mrf.mxu0
    %v1989 = vadd.f32 %v1946, %v1988
    %v1990 = vpop.f32.mrf.mxu0
    %v1991 = vadd.f32 %v1948, %v1990
    %v1992 = vpop.f32.mrf.mxu0
    %v1993 = vadd.f32 %v1950, %v1992
    %v1994 = vpop.f32.mrf.mxu0
    %v1995 = vadd.f32 %v1952, %v1994
    %1996 = vdwg.mxu0
    %1997 = vmatprep.subr.bf16.mxu0 %v1407
    %1998 = vmatpush1.bf16.msra.mxu0 %v1406
    %1999 = vmatprep.subr.bf16.mxu0 %v1403
    %2000 = vmatpush1.bf16.msra.mxu0 %v1402
    %2001 = vmatprep.subr.bf16.mxu0 %v1399
    %2002 = vmatpush1.bf16.msra.mxu0 %v1398
    %2003 = vmatprep.subr.bf16.mxu0 %v1395
    %2004 = vmatpush1.bf16.msra.mxu0 %v1394
    %2005 = vmatprep.subr.bf16.mxu0 %v1391
    %2006 = vmatpush1.bf16.msra.mxu0 %v1390
    %2007 = vmatprep.subr.bf16.mxu0 %v1387
    %2008 = vmatpush1.bf16.msra.mxu0 %v1386
    %2009 = vmatprep.subr.bf16.mxu0 %v1383
    %2010 = vmatpush1.bf16.msra.mxu0 %v1382
    %2011 = vmatprep.subr.bf16.mxu0 %v1379
    %2012 = vmatpush1.bf16.msra.mxu0 %v1378
    %2013 = vmatprep.subr.bf16.mxu0 %v1439
    %2014 = vmatpush2.bf16.msra.mxu0 %v1438
    %2015 = vmatprep.subr.bf16.mxu0 %v1435
    %2016 = vmatpush2.bf16.msra.mxu0 %v1434
    %2017 = vmatprep.subr.bf16.mxu0 %v1431
    %2018 = vmatpush2.bf16.msra.mxu0 %v1430
    %2019 = vmatprep.subr.bf16.mxu0 %v1427
    %2020 = vmatpush2.bf16.msra.mxu0 %v1426
    %2021 = vmatprep.subr.bf16.mxu0 %v1423
    %2022 = vmatpush2.bf16.msra.mxu0 %v1422
    %2023 = vmatprep.subr.bf16.mxu0 %v1419
    %2024 = vmatpush2.bf16.msra.mxu0 %v1418
    %2025 = vmatprep.subr.bf16.mxu0 %v1415
    %2026 = vmatpush2.bf16.msra.mxu0 %v1414
    %2027 = vmatprep.subr.bf16.mxu0 %v1411
    %2028 = vmatpush2.bf16.msra.mxu0 %v1410
    %2029 = vmatprep.mubr.bf16.mxu0 %v137
    %2030 = vmatmul.mubr.bf16.gmra.mxu0 %v136
    %v2031 = vpop.f32.mrf.mxu0
    %v2032 = vadd.f32 %v1989, %v2031
    %v2033 = vpop.f32.mrf.mxu0
    %v2034 = vadd.f32 %v1991, %v2033
    %v2035 = vpop.f32.mrf.mxu0
    %v2036 = vadd.f32 %v1993, %v2035
    %v2037 = vpop.f32.mrf.mxu0
    %v2038 = vadd.f32 %v1995, %v2037
    %2039 = vdwg.mxu0
    %v2040 = vmax.f32 %v1860, 0.0
    %v2041 = vmax.f32 %v1862, 0.0
    %v2042 = vmax.f32 %v2032, 0.0
    %v2043 = vmax.f32 %v2034, 0.0
    %v2044 = vmax.f32 %v1864, 0.0
    %v2045 = vmax.f32 %v1866, 0.0
    %v2046 = vmax.f32 %v2036, 0.0
    %v2047 = vmax.f32 %v2038, 0.0
    %v2048 = vpack.c.bf16 %v2044, %v2040
    %v2049 = vpack.c.bf16 %v2045, %v2041
    %v2050 = vpack.c.bf16 %v2046, %v2042
    %v2051 = vpack.c.bf16 %v2047, %v2043
    %v2052 = vld [vmem:[#allocation8] sm:$0xff]
    %v2053 = vld [vmem:[#allocation8 + $0x8] sm:$0xff]
    %v2054 = vld [vmem:[#allocation8 + $0x10] sm:$0xff]
    %v2055 = vld [vmem:[#allocation8 + $0x18] sm:$0xff]
    %v2056 = vld [vmem:[#allocation8 + $0x20] sm:$0xff]
    %v2057 = vld [vmem:[#allocation8 + $0x28] sm:$0xff]
    %v2058 = vld [vmem:[#allocation8 + $0x30] sm:$0xff]
    %v2059 = vld [vmem:[#allocation8 + $0x38] sm:$0xff]
    %v2060 = vld [vmem:[#allocation8 + $0x40] sm:$0xff]
    %v2061 = vld [vmem:[#allocation8 + $0x48] sm:$0xff]
    %v2062 = vld [vmem:[#allocation8 + $0x50] sm:$0xff]
    %v2063 = vld [vmem:[#allocation8 + $0x58] sm:$0xff]
    %v2064 = vld [vmem:[#allocation8 + $0x60] sm:$0xff]
    %v2065 = vld [vmem:[#allocation8 + $0x68] sm:$0xff]
    %v2066 = vld [vmem:[#allocation8 + $0x70] sm:$0xff]
    %v2067 = vld [vmem:[#allocation8 + $0x78] sm:$0xff]
    %v2068 = vld [vmem:[#allocation8 + $0x80] sm:$0xff]
    %v2069 = vld [vmem:[#allocation8 + $0x88] sm:$0xff]
    %v2070 = vld [vmem:[#allocation8 + $0x90] sm:$0xff]
    %v2071 = vld [vmem:[#allocation8 + $0x98] sm:$0xff]
    %v2072 = vld [vmem:[#allocation8 + $0xa0] sm:$0xff]
    %v2073 = vld [vmem:[#allocation8 + $0xa8] sm:$0xff]
    %v2074 = vld [vmem:[#allocation8 + $0xb0] sm:$0xff]
    %v2075 = vld [vmem:[#allocation8 + $0xb8] sm:$0xff]
    %v2076 = vld [vmem:[#allocation8 + $0xc0] sm:$0xff]
    %v2077 = vld [vmem:[#allocation8 + $0xc8] sm:$0xff]
    %v2078 = vld [vmem:[#allocation8 + $0xd0] sm:$0xff]
    %v2079 = vld [vmem:[#allocation8 + $0xd8] sm:$0xff]
    %v2080 = vld [vmem:[#allocation8 + $0xe0] sm:$0xff]
    %v2081 = vld [vmem:[#allocation8 + $0xe8] sm:$0xff]
    %v2082 = vld [vmem:[#allocation8 + $0xf0] sm:$0xff]
    %v2083 = vld [vmem:[#allocation8 + $0xf8] sm:$0xff]
    %v2084 = vld [vmem:[#allocation8 + $0x100] sm:$0xff]
    %v2085 = vld [vmem:[#allocation8 + $0x108] sm:$0xff]
    %v2086 = vld [vmem:[#allocation8 + $0x110] sm:$0xff]
    %v2087 = vld [vmem:[#allocation8 + $0x118] sm:$0xff]
    %v2088 = vld [vmem:[#allocation8 + $0x120] sm:$0xff]
    %v2089 = vld [vmem:[#allocation8 + $0x128] sm:$0xff]
    %v2090 = vld [vmem:[#allocation8 + $0x130] sm:$0xff]
    %v2091 = vld [vmem:[#allocation8 + $0x138] sm:$0xff]
    %v2092 = vld [vmem:[#allocation8 + $0x140] sm:$0xff]
    %v2093 = vld [vmem:[#allocation8 + $0x148] sm:$0xff]
    %v2094 = vld [vmem:[#allocation8 + $0x150] sm:$0xff]
    %v2095 = vld [vmem:[#allocation8 + $0x158] sm:$0xff]
    %v2096 = vld [vmem:[#allocation8 + $0x160] sm:$0xff]
    %v2097 = vld [vmem:[#allocation8 + $0x168] sm:$0xff]
    %v2098 = vld [vmem:[#allocation8 + $0x170] sm:$0xff]
    %v2099 = vld [vmem:[#allocation8 + $0x178] sm:$0xff]
    %v2100 = vld [vmem:[#allocation8 + $0x180] sm:$0xff]
    %v2101 = vld [vmem:[#allocation8 + $0x188] sm:$0xff]
    %v2102 = vld [vmem:[#allocation8 + $0x190] sm:$0xff]
    %v2103 = vld [vmem:[#allocation8 + $0x198] sm:$0xff]
    %v2104 = vld [vmem:[#allocation8 + $0x1a0] sm:$0xff]
    %v2105 = vld [vmem:[#allocation8 + $0x1a8] sm:$0xff]
    %v2106 = vld [vmem:[#allocation8 + $0x1b0] sm:$0xff]
    %v2107 = vld [vmem:[#allocation8 + $0x1b8] sm:$0xff]
    %v2108 = vld [vmem:[#allocation8 + $0x1c0] sm:$0xff]
    %v2109 = vld [vmem:[#allocation8 + $0x1c8] sm:$0xff]
    %v2110 = vld [vmem:[#allocation8 + $0x1d0] sm:$0xff]
    %v2111 = vld [vmem:[#allocation8 + $0x1d8] sm:$0xff]
    %v2112 = vld [vmem:[#allocation8 + $0x1e0] sm:$0xff]
    %v2113 = vld [vmem:[#allocation8 + $0x1e8] sm:$0xff]
    %v2114 = vld [vmem:[#allocation8 + $0x1f0] sm:$0xff]
    %v2115 = vld [vmem:[#allocation8 + $0x1f8] sm:$0xff]
    %v2116 = vld [vmem:[%s4] sm:$0x3]
    %v2118 = vlaneseq
    %v2119 = vshrl.u32 %v2118, 7
    %v2120 = vsub.s32 0, %v2119
    %v2121 = vrot.slane %v2116, %v2120
    %v2122 = vlaneseq
    %v2123 = vshrl.u32 %v2122, 7
    %v2124 = vsub.s32 1, %v2123
    %v2125 = vrot.slane %v2116, %v2124
    %v2192 = vunpack.c.l.b16 %v2052
    %v2193 = vunpack.c.h.b16 %v2052
    %v2194 = vunpack.c.l.b16 %v2053
    %v2195 = vunpack.c.h.b16 %v2053
    %v2196 = vunpack.c.l.b16 %v2054
    %v2197 = vunpack.c.h.b16 %v2054
    %v2198 = vunpack.c.l.b16 %v2055
    %v2199 = vunpack.c.h.b16 %v2055
    %v2200 = vunpack.c.l.b16 %v2056
    %v2201 = vunpack.c.h.b16 %v2056
    %v2202 = vunpack.c.l.b16 %v2057
    %v2203 = vunpack.c.h.b16 %v2057
    %v2204 = vunpack.c.l.b16 %v2058
    %v2205 = vunpack.c.h.b16 %v2058
    %v2206 = vunpack.c.l.b16 %v2059
    %v2207 = vunpack.c.h.b16 %v2059
    %v2208 = vunpack.c.l.b16 %v2060
    %v2209 = vunpack.c.h.b16 %v2060
    %v2210 = vunpack.c.l.b16 %v2061
    %v2211 = vunpack.c.h.b16 %v2061
    %v2212 = vunpack.c.l.b16 %v2062
    %v2213 = vunpack.c.h.b16 %v2062
    %v2214 = vunpack.c.l.b16 %v2063
    %v2215 = vunpack.c.h.b16 %v2063
    %v2216 = vunpack.c.l.b16 %v2064
    %v2217 = vunpack.c.h.b16 %v2064
    %v2218 = vunpack.c.l.b16 %v2065
    %v2219 = vunpack.c.h.b16 %v2065
    %v2220 = vunpack.c.l.b16 %v2066
    %v2221 = vunpack.c.h.b16 %v2066
    %v2222 = vunpack.c.l.b16 %v2067
    %v2223 = vunpack.c.h.b16 %v2067
    %v2224 = vunpack.c.l.b16 %v2068
    %v2225 = vunpack.c.h.b16 %v2068
    %v2226 = vunpack.c.l.b16 %v2069
    %v2227 = vunpack.c.h.b16 %v2069
    %v2228 = vunpack.c.l.b16 %v2070
    %v2229 = vunpack.c.h.b16 %v2070
    %v2230 = vunpack.c.l.b16 %v2071
    %v2231 = vunpack.c.h.b16 %v2071
    %v2232 = vunpack.c.l.b16 %v2072
    %v2233 = vunpack.c.h.b16 %v2072
    %v2234 = vunpack.c.l.b16 %v2073
    %v2235 = vunpack.c.h.b16 %v2073
    %v2236 = vunpack.c.l.b16 %v2074
    %v2237 = vunpack.c.h.b16 %v2074
    %v2238 = vunpack.c.l.b16 %v2075
    %v2239 = vunpack.c.h.b16 %v2075
    %v2240 = vunpack.c.l.b16 %v2076
    %v2241 = vunpack.c.h.b16 %v2076
    %v2242 = vunpack.c.l.b16 %v2077
    %v2243 = vunpack.c.h.b16 %v2077
    %v2244 = vunpack.c.l.b16 %v2078
    %v2245 = vunpack.c.h.b16 %v2078
    %v2246 = vunpack.c.l.b16 %v2079
    %v2247 = vunpack.c.h.b16 %v2079
    %v2248 = vunpack.c.l.b16 %v2080
    %v2249 = vunpack.c.h.b16 %v2080
    %v2250 = vunpack.c.l.b16 %v2081
    %v2251 = vunpack.c.h.b16 %v2081
    %v2252 = vunpack.c.l.b16 %v2082
    %v2253 = vunpack.c.h.b16 %v2082
    %v2254 = vunpack.c.l.b16 %v2083
    %v2255 = vunpack.c.h.b16 %v2083
    %v2256 = vunpack.c.l.b16 %v2084
    %v2257 = vunpack.c.h.b16 %v2084
    %v2258 = vunpack.c.l.b16 %v2085
    %v2259 = vunpack.c.h.b16 %v2085
    %v2260 = vunpack.c.l.b16 %v2086
    %v2261 = vunpack.c.h.b16 %v2086
    %v2262 = vunpack.c.l.b16 %v2087
    %v2263 = vunpack.c.h.b16 %v2087
    %v2264 = vunpack.c.l.b16 %v2088
    %v2265 = vunpack.c.h.b16 %v2088
    %v2266 = vunpack.c.l.b16 %v2089
    %v2267 = vunpack.c.h.b16 %v2089
    %v2268 = vunpack.c.l.b16 %v2090
    %v2269 = vunpack.c.h.b16 %v2090
    %v2270 = vunpack.c.l.b16 %v2091
    %v2271 = vunpack.c.h.b16 %v2091
    %v2272 = vunpack.c.l.b16 %v2092
    %v2273 = vunpack.c.h.b16 %v2092
    %v2274 = vunpack.c.l.b16 %v2093
    %v2275 = vunpack.c.h.b16 %v2093
    %v2276 = vunpack.c.l.b16 %v2094
    %v2277 = vunpack.c.h.b16 %v2094
    %v2278 = vunpack.c.l.b16 %v2095
    %v2279 = vunpack.c.h.b16 %v2095
    %v2280 = vunpack.c.l.b16 %v2096
    %v2281 = vunpack.c.h.b16 %v2096
    %v2282 = vunpack.c.l.b16 %v2097
    %v2283 = vunpack.c.h.b16 %v2097
    %v2284 = vunpack.c.l.b16 %v2098
    %v2285 = vunpack.c.h.b16 %v2098
    %v2286 = vunpack.c.l.b16 %v2099
    %v2287 = vunpack.c.h.b16 %v2099
    %v2288 = vunpack.c.l.b16 %v2100
    %v2289 = vunpack.c.h.b16 %v2100
    %v2290 = vunpack.c.l.b16 %v2101
    %v2291 = vunpack.c.h.b16 %v2101
    %v2292 = vunpack.c.l.b16 %v2102
    %v2293 = vunpack.c.h.b16 %v2102
    %v2294 = vunpack.c.l.b16 %v2103
    %v2295 = vunpack.c.h.b16 %v2103
    %v2296 = vunpack.c.l.b16 %v2104
    %v2297 = vunpack.c.h.b16 %v2104
    %v2298 = vunpack.c.l.b16 %v2105
    %v2299 = vunpack.c.h.b16 %v2105
    %v2300 = vunpack.c.l.b16 %v2106
    %v2301 = vunpack.c.h.b16 %v2106
    %v2302 = vunpack.c.l.b16 %v2107
    %v2303 = vunpack.c.h.b16 %v2107
    %v2304 = vunpack.c.l.b16 %v2108
    %v2305 = vunpack.c.h.b16 %v2108
    %v2306 = vunpack.c.l.b16 %v2109
    %v2307 = vunpack.c.h.b16 %v2109
    %v2308 = vunpack.c.l.b16 %v2110
    %v2309 = vunpack.c.h.b16 %v2110
    %v2310 = vunpack.c.l.b16 %v2111
    %v2311 = vunpack.c.h.b16 %v2111
    %v2312 = vunpack.c.l.b16 %v2112
    %v2313 = vunpack.c.h.b16 %v2112
    %v2314 = vunpack.c.l.b16 %v2113
    %v2315 = vunpack.c.h.b16 %v2113
    %v2316 = vunpack.c.l.b16 %v2114
    %v2317 = vunpack.c.h.b16 %v2114
    %v2318 = vunpack.c.l.b16 %v2115
    %v2319 = vunpack.c.h.b16 %v2115
    %v2320 = vpack.c.b16 %v2194, %v2192
    %v2321 = vpack.c.b16 %v2195, %v2193
    %v2322 = vpack.c.b16 %v2198, %v2196
    %v2323 = vpack.c.b16 %v2199, %v2197
    %v2324 = vpack.c.b16 %v2202, %v2200
    %v2325 = vpack.c.b16 %v2203, %v2201
    %v2326 = vpack.c.b16 %v2206, %v2204
    %v2327 = vpack.c.b16 %v2207, %v2205
    %v2328 = vpack.c.b16 %v2210, %v2208
    %v2329 = vpack.c.b16 %v2211, %v2209
    %v2330 = vpack.c.b16 %v2214, %v2212
    %v2331 = vpack.c.b16 %v2215, %v2213
    %v2332 = vpack.c.b16 %v2218, %v2216
    %v2333 = vpack.c.b16 %v2219, %v2217
    %v2334 = vpack.c.b16 %v2222, %v2220
    %v2335 = vpack.c.b16 %v2223, %v2221
    %v2336 = vpack.c.b16 %v2226, %v2224
    %v2337 = vpack.c.b16 %v2227, %v2225
    %v2338 = vpack.c.b16 %v2230, %v2228
    %v2339 = vpack.c.b16 %v2231, %v2229
    %v2340 = vpack.c.b16 %v2234, %v2232
    %v2341 = vpack.c.b16 %v2235, %v2233
    %v2342 = vpack.c.b16 %v2238, %v2236
    %v2343 = vpack.c.b16 %v2239, %v2237
    %v2344 = vpack.c.b16 %v2242, %v2240
    %v2345 = vpack.c.b16 %v2243, %v2241
    %v2346 = vpack.c.b16 %v2246, %v2244
    %v2347 = vpack.c.b16 %v2247, %v2245
    %v2348 = vpack.c.b16 %v2250, %v2248
    %v2349 = vpack.c.b16 %v2251, %v2249
    %v2350 = vpack.c.b16 %v2254, %v2252
    %v2351 = vpack.c.b16 %v2255, %v2253
    %v2352 = vpack.c.b16 %v2258, %v2256
    %v2353 = vpack.c.b16 %v2259, %v2257
    %v2354 = vpack.c.b16 %v2262, %v2260
    %v2355 = vpack.c.b16 %v2263, %v2261
    %v2356 = vpack.c.b16 %v2266, %v2264
    %v2357 = vpack.c.b16 %v2267, %v2265
    %v2358 = vpack.c.b16 %v2270, %v2268
    %v2359 = vpack.c.b16 %v2271, %v2269
    %v2360 = vpack.c.b16 %v2274, %v2272
    %v2361 = vpack.c.b16 %v2275, %v2273
    %v2362 = vpack.c.b16 %v2278, %v2276
    %v2363 = vpack.c.b16 %v2279, %v2277
    %v2364 = vpack.c.b16 %v2282, %v2280
    %v2365 = vpack.c.b16 %v2283, %v2281
    %v2366 = vpack.c.b16 %v2286, %v2284
    %v2367 = vpack.c.b16 %v2287, %v2285
    %v2368 = vpack.c.b16 %v2290, %v2288
    %v2369 = vpack.c.b16 %v2291, %v2289
    %v2370 = vpack.c.b16 %v2294, %v2292
    %v2371 = vpack.c.b16 %v2295, %v2293
    %v2372 = vpack.c.b16 %v2298, %v2296
    %v2373 = vpack.c.b16 %v2299, %v2297
    %v2374 = vpack.c.b16 %v2302, %v2300
    %v2375 = vpack.c.b16 %v2303, %v2301
    %v2376 = vpack.c.b16 %v2306, %v2304
    %v2377 = vpack.c.b16 %v2307, %v2305
    %v2378 = vpack.c.b16 %v2310, %v2308
    %v2379 = vpack.c.b16 %v2311, %v2309
    %v2380 = vpack.c.b16 %v2314, %v2312
    %v2381 = vpack.c.b16 %v2315, %v2313
    %v2382 = vpack.c.b16 %v2318, %v2316
    %v2383 = vpack.c.b16 %v2319, %v2317
    %2448 = vmatprep.subr.bf16.mxu0 %v2335
    %2449 = vmatpush1.bf16.msra.mxu0 %v2334
    %2450 = vmatprep.subr.bf16.mxu0 %v2333
    %2451 = vmatpush1.bf16.msra.mxu0 %v2332
    %2452 = vmatprep.subr.bf16.mxu0 %v2331
    %2453 = vmatpush1.bf16.msra.mxu0 %v2330
    %2454 = vmatprep.subr.bf16.mxu0 %v2329
    %2455 = vmatpush1.bf16.msra.mxu0 %v2328
    %2456 = vmatprep.subr.bf16.mxu0 %v2327
    %2457 = vmatpush1.bf16.msra.mxu0 %v2326
    %2458 = vmatprep.subr.bf16.mxu0 %v2325
    %2459 = vmatpush1.bf16.msra.mxu0 %v2324
    %2460 = vmatprep.subr.bf16.mxu0 %v2323
    %2461 = vmatpush1.bf16.msra.mxu0 %v2322
    %2462 = vmatprep.subr.bf16.mxu0 %v2321
    %2463 = vmatpush1.bf16.msra.mxu0 %v2320
    %2464 = vmatprep.subr.bf16.mxu0 %v2351
    %2465 = vmatpush2.bf16.msra.mxu0 %v2350
    %2466 = vmatprep.subr.bf16.mxu0 %v2349
    %2467 = vmatpush2.bf16.msra.mxu0 %v2348
    %2468 = vmatprep.subr.bf16.mxu0 %v2347
    %2469 = vmatpush2.bf16.msra.mxu0 %v2346
    %2470 = vmatprep.subr.bf16.mxu0 %v2345
    %2471 = vmatpush2.bf16.msra.mxu0 %v2344
    %2472 = vmatprep.subr.bf16.mxu0 %v2343
    %2473 = vmatpush2.bf16.msra.mxu0 %v2342
    %2474 = vmatprep.subr.bf16.mxu0 %v2341
    %2475 = vmatpush2.bf16.msra.mxu0 %v2340
    %2476 = vmatprep.subr.bf16.mxu0 %v2339
    %2477 = vmatpush2.bf16.msra.mxu0 %v2338
    %2478 = vmatprep.subr.bf16.mxu0 %v2337
    %2479 = vmatpush2.bf16.msra.mxu0 %v2336
    %2480 = vmatprep.mubr.bf16.mxu0 %v2049
    %2481 = vmatmul.mubr.bf16.gmra.mxu0 %v2048
    %v2482 = vpop.f32.mrf.mxu0
    %v2483 = vadd.f32 %v2121, %v2482
    %v2484 = vpop.f32.mrf.mxu0
    %v2485 = vadd.f32 %v2125, %v2484
    %v2486 = vpop.f32.mrf.mxu0
    %v2487 = vadd.f32 %v2121, %v2486
    %v2488 = vpop.f32.mrf.mxu0
    %v2489 = vadd.f32 %v2125, %v2488
    %2490 = vdwg.mxu0
    %2491 = vmatprep.subr.bf16.mxu0 %v2367
    %2492 = vmatpush1.bf16.msra.mxu0 %v2366
    %2493 = vmatprep.subr.bf16.mxu0 %v2365
    %2494 = vmatpush1.bf16.msra.mxu0 %v2364
    %2495 = vmatprep.subr.bf16.mxu0 %v2363
    %2496 = vmatpush1.bf16.msra.mxu0 %v2362
    %2497 = vmatprep.subr.bf16.mxu0 %v2361
    %2498 = vmatpush1.bf16.msra.mxu0 %v2360
    %2499 = vmatprep.subr.bf16.mxu0 %v2359
    %2500 = vmatpush1.bf16.msra.mxu0 %v2358
    %2501 = vmatprep.subr.bf16.mxu0 %v2357
    %2502 = vmatpush1.bf16.msra.mxu0 %v2356
    %2503 = vmatprep.subr.bf16.mxu0 %v2355
    %2504 = vmatpush1.bf16.msra.mxu0 %v2354
    %2505 = vmatprep.subr.bf16.mxu0 %v2353
    %2506 = vmatpush1.bf16.msra.mxu0 %v2352
    %2507 = vmatprep.subr.bf16.mxu0 %v2383
    %2508 = vmatpush2.bf16.msra.mxu0 %v2382
    %2509 = vmatprep.subr.bf16.mxu0 %v2381
    %2510 = vmatpush2.bf16.msra.mxu0 %v2380
    %2511 = vmatprep.subr.bf16.mxu0 %v2379
    %2512 = vmatpush2.bf16.msra.mxu0 %v2378
    %2513 = vmatprep.subr.bf16.mxu0 %v2377
    %2514 = vmatpush2.bf16.msra.mxu0 %v2376
    %2515 = vmatprep.subr.bf16.mxu0 %v2375
    %2516 = vmatpush2.bf16.msra.mxu0 %v2374
    %2517 = vmatprep.subr.bf16.mxu0 %v2373
    %2518 = vmatpush2.bf16.msra.mxu0 %v2372
    %2519 = vmatprep.subr.bf16.mxu0 %v2371
    %2520 = vmatpush2.bf16.msra.mxu0 %v2370
    %2521 = vmatprep.subr.bf16.mxu0 %v2369
    %2522 = vmatpush2.bf16.msra.mxu0 %v2368
    %2523 = vmatprep.mubr.bf16.mxu0 %v2051
    %2524 = vmatmul.mubr.bf16.gmra.mxu0 %v2050
    %v2525 = vpop.f32.mrf.mxu0
    %v2526 = vadd.f32 %v2483, %v2525
    %v2527 = vpop.f32.mrf.mxu0
    %v2528 = vadd.f32 %v2485, %v2527
    %v2529 = vpop.f32.mrf.mxu0
    %v2530 = vadd.f32 %v2487, %v2529
    %v2531 = vpop.f32.mrf.mxu0
    %v2532 = vadd.f32 %v2489, %v2531
    %2533 = vdwg.mxu0
    %v2534 = vmax.f32 %v2526, 0.0
    %v2535 = vmax.f32 %v2528, 0.0
    %v2536 = vmax.f32 %v2530, 0.0
    %v2537 = vmax.f32 %v2532, 0.0
    %v2538 = vpack.c.bf16 %v2536, %v2534
    %v2539 = vpack.c.bf16 %v2537, %v2535
    %v2540 = vld [vmem:[#allocation10] sm:$0xf]
    %v2541 = vld [vmem:[#allocation10 + $0x4] sm:$0xf]
    %v2542 = vld [vmem:[#allocation10 + $0x8] sm:$0xf]
    %v2543 = vld [vmem:[#allocation10 + $0xc] sm:$0xf]
    %v2544 = vld [vmem:[#allocation10 + $0x10] sm:$0xf]
    %v2545 = vld [vmem:[#allocation10 + $0x14] sm:$0xf]
    %v2546 = vld [vmem:[#allocation10 + $0x18] sm:$0xf]
    %v2547 = vld [vmem:[#allocation10 + $0x1c] sm:$0xf]
    %v2548 = vld [vmem:[#allocation10 + $0x20] sm:$0xf]
    %v2549 = vld [vmem:[#allocation10 + $0x24] sm:$0xf]
    %v2550 = vld [vmem:[#allocation10 + $0x28] sm:$0xf]
    %v2551 = vld [vmem:[#allocation10 + $0x2c] sm:$0xf]
    %v2552 = vld [vmem:[#allocation10 + $0x30] sm:$0xf]
    %v2553 = vld [vmem:[#allocation10 + $0x34] sm:$0xf]
    %v2554 = vld [vmem:[#allocation10 + $0x38] sm:$0xf]
    %v2555 = vld [vmem:[#allocation10 + $0x3c] sm:$0xf]
    %v2556 = vld [vmem:[#allocation10 + $0x40] sm:$0xf]
    %v2557 = vld [vmem:[#allocation10 + $0x44] sm:$0xf]
    %v2558 = vld [vmem:[#allocation10 + $0x48] sm:$0xf]
    %v2559 = vld [vmem:[#allocation10 + $0x4c] sm:$0xf]
    %v2560 = vld [vmem:[#allocation10 + $0x50] sm:$0xf]
    %v2561 = vld [vmem:[#allocation10 + $0x54] sm:$0xf]
    %v2562 = vld [vmem:[#allocation10 + $0x58] sm:$0xf]
    %v2563 = vld [vmem:[#allocation10 + $0x5c] sm:$0xf]
    %v2564 = vld [vmem:[#allocation10 + $0x60] sm:$0xf]
    %v2565 = vld [vmem:[#allocation10 + $0x64] sm:$0xf]
    %v2566 = vld [vmem:[#allocation10 + $0x68] sm:$0xf]
    %v2567 = vld [vmem:[#allocation10 + $0x6c] sm:$0xf]
    %v2568 = vld [vmem:[#allocation10 + $0x70] sm:$0xf]
    %v2569 = vld [vmem:[#allocation10 + $0x74] sm:$0xf]
    %v2570 = vld [vmem:[#allocation10 + $0x78] sm:$0xf]
    %v2571 = vld [vmem:[#allocation10 + $0x7c] sm:$0xf]
    %v2572 = vld [vmem:[%s6] sm:$0x1]
    %v2574 = vlaneseq
    %v2575 = vshrl.u32 %v2574, 7
    %v2576 = vsub.s32 0, %v2575
    %v2577 = vrot.slane %v2572, %v2576
    %v2611 = vunpack.c.l.b16 %v2540
    %v2612 = vunpack.c.l.b16 %v2541
    %v2613 = vunpack.c.l.b16 %v2542
    %v2614 = vunpack.c.l.b16 %v2543
    %v2615 = vunpack.c.l.b16 %v2544
    %v2616 = vunpack.c.l.b16 %v2545
    %v2617 = vunpack.c.l.b16 %v2546
    %v2618 = vunpack.c.l.b16 %v2547
    %v2619 = vunpack.c.l.b16 %v2548
    %v2620 = vunpack.c.l.b16 %v2549
    %v2621 = vunpack.c.l.b16 %v2550
    %v2622 = vunpack.c.l.b16 %v2551
    %v2623 = vunpack.c.l.b16 %v2552
    %v2624 = vunpack.c.l.b16 %v2553
    %v2625 = vunpack.c.l.b16 %v2554
    %v2626 = vunpack.c.l.b16 %v2555
    %v2627 = vunpack.c.l.b16 %v2556
    %v2628 = vunpack.c.l.b16 %v2557
    %v2629 = vunpack.c.l.b16 %v2558
    %v2630 = vunpack.c.l.b16 %v2559
    %v2631 = vunpack.c.l.b16 %v2560
    %v2632 = vunpack.c.l.b16 %v2561
    %v2633 = vunpack.c.l.b16 %v2562
    %v2634 = vunpack.c.l.b16 %v2563
    %v2635 = vunpack.c.l.b16 %v2564
    %v2636 = vunpack.c.l.b16 %v2565
    %v2637 = vunpack.c.l.b16 %v2566
    %v2638 = vunpack.c.l.b16 %v2567
    %v2639 = vunpack.c.l.b16 %v2568
    %v2640 = vunpack.c.l.b16 %v2569
    %v2641 = vunpack.c.l.b16 %v2570
    %v2642 = vunpack.c.l.b16 %v2571
    %v2643 = vpack.c.b16 %v2612, %v2611
    %v2644 = vpack.c.b16 %v2614, %v2613
    %v2645 = vpack.c.b16 %v2616, %v2615
    %v2646 = vpack.c.b16 %v2618, %v2617
    %v2647 = vpack.c.b16 %v2620, %v2619
    %v2648 = vpack.c.b16 %v2622, %v2621
    %v2649 = vpack.c.b16 %v2624, %v2623
    %v2650 = vpack.c.b16 %v2626, %v2625
    %v2651 = vpack.c.b16 %v2628, %v2627
    %v2652 = vpack.c.b16 %v2630, %v2629
    %v2653 = vpack.c.b16 %v2632, %v2631
    %v2654 = vpack.c.b16 %v2634, %v2633
    %v2655 = vpack.c.b16 %v2636, %v2635
    %v2656 = vpack.c.b16 %v2638, %v2637
    %v2657 = vpack.c.b16 %v2640, %v2639
    %v2658 = vpack.c.b16 %v2642, %v2641
    %2675 = vmatprep.subr.bf16.mxu0 0
    %2676 = vmatpush1.bf16.msra.mxu0 %v2650
    %2677 = vmatprep.subr.bf16.mxu0 0
    %2678 = vmatpush1.bf16.msra.mxu0 %v2649
    %2679 = vmatprep.subr.bf16.mxu0 0
    %2680 = vmatpush1.bf16.msra.mxu0 %v2648
    %2681 = vmatprep.subr.bf16.mxu0 0
    %2682 = vmatpush1.bf16.msra.mxu0 %v2647
    %2683 = vmatprep.subr.bf16.mxu0 0
    %2684 = vmatpush1.bf16.msra.mxu0 %v2646
    %2685 = vmatprep.subr.bf16.mxu0 0
    %2686 = vmatpush1.bf16.msra.mxu0 %v2645
    %2687 = vmatprep.subr.bf16.mxu0 0
    %2688 = vmatpush1.bf16.msra.mxu0 %v2644
    %2689 = vmatprep.subr.bf16.mxu0 0
    %2690 = vmatpush1.bf16.msra.mxu0 %v2643
    %2691 = vmatprep.subr.bf16.mxu0 0
    %2692 = vmatpush2.bf16.msra.mxu0 %v2658
    %2693 = vmatprep.subr.bf16.mxu0 0
    %2694 = vmatpush2.bf16.msra.mxu0 %v2657
    %2695 = vmatprep.subr.bf16.mxu0 0
    %2696 = vmatpush2.bf16.msra.mxu0 %v2656
    %2697 = vmatprep.subr.bf16.mxu0 0
    %2698 = vmatpush2.bf16.msra.mxu0 %v2655
    %2699 = vmatprep.subr.bf16.mxu0 0
    %2700 = vmatpush2.bf16.msra.mxu0 %v2654
    %2701 = vmatprep.subr.bf16.mxu0 0
    %2702 = vmatpush2.bf16.msra.mxu0 %v2653
    %2703 = vmatprep.subr.bf16.mxu0 0
    %2704 = vmatpush2.bf16.msra.mxu0 %v2652
    %2705 = vmatprep.subr.bf16.mxu0 0
    %2706 = vmatpush2.bf16.msra.mxu0 %v2651
    %2707 = vmatprep.mubr.bf16.mxu0 %v2539
    %2708 = vmatmul.mubr.bf16.gmra.mxu0 %v2538
    %v2709 = vpop.f32.mrf.mxu0
    %v2710 = vadd.f32 %v2577, %v2709
    %v2711 = vpop.f32.mrf.mxu0
    %v2712 = vpop.f32.mrf.mxu0
    %v2713 = vadd.f32 %v2577, %v2712
    %v2714 = vpop.f32.mrf.mxu0
    %2715 = vdwg.mxu0
    %v2716 = vmax.f32 %v2710, 0.0
    %v2717 = vmax.f32 %v2713, 0.0
    %v2718 = vpack.c.bf16 %v2717, %v2716
    %v2719 = vld [vmem:[#allocation11] sm:$0xf]
    %v2720 = vld [vmem:[#allocation11 + $0x4] sm:$0xf]
    %v2721 = vld [vmem:[#allocation11 + $0x8] sm:$0xf]
    %v2722 = vld [vmem:[#allocation11 + $0xc] sm:$0xf]
    %v2723 = vld [vmem:[#allocation11 + $0x10] sm:$0xf]
    %v2724 = vld [vmem:[#allocation11 + $0x14] sm:$0xf]
    %v2725 = vld [vmem:[#allocation11 + $0x18] sm:$0xf]
    %v2726 = vld [vmem:[#allocation11 + $0x1c] sm:$0xf]
    %v2727 = vld [vmem:[#allocation11 + $0x20] sm:$0xf]
    %v2728 = vld [vmem:[#allocation11 + $0x24] sm:$0xf]
    %v2729 = vld [vmem:[#allocation11 + $0x28] sm:$0xf]
    %v2730 = vld [vmem:[#allocation11 + $0x2c] sm:$0xf]
    %v2731 = vld [vmem:[#allocation11 + $0x30] sm:$0xf]
    %v2732 = vld [vmem:[#allocation11 + $0x34] sm:$0xf]
    %v2733 = vld [vmem:[#allocation11 + $0x38] sm:$0xf]
    %v2734 = vld [vmem:[#allocation11 + $0x3c] sm:$0xf]
    %v2735 = vld [vmem:[%s8] sm:$0x1]
    %v2737 = vlaneseq
    %v2738 = vshrl.u32 %v2737, 7
    %v2739 = vsub.s32 0, %v2738
    %v2740 = vrot.slane %v2735, %v2739
    %v2758 = vunpack.c.l.b16 %v2719
    %v2759 = vunpack.c.l.b16 %v2720
    %v2760 = vunpack.c.l.b16 %v2721
    %v2761 = vunpack.c.l.b16 %v2722
    %v2762 = vunpack.c.l.b16 %v2723
    %v2763 = vunpack.c.l.b16 %v2724
    %v2764 = vunpack.c.l.b16 %v2725
    %v2765 = vunpack.c.l.b16 %v2726
    %v2766 = vunpack.c.l.b16 %v2727
    %v2767 = vunpack.c.l.b16 %v2728
    %v2768 = vunpack.c.l.b16 %v2729
    %v2769 = vunpack.c.l.b16 %v2730
    %v2770 = vunpack.c.l.b16 %v2731
    %v2771 = vunpack.c.l.b16 %v2732
    %v2772 = vunpack.c.l.b16 %v2733
    %v2773 = vunpack.c.l.b16 %v2734
    %v2774 = vpack.c.b16 %v2759, %v2758
    %v2775 = vpack.c.b16 %v2761, %v2760
    %v2776 = vpack.c.b16 %v2763, %v2762
    %v2777 = vpack.c.b16 %v2765, %v2764
    %v2778 = vpack.c.b16 %v2767, %v2766
    %v2779 = vpack.c.b16 %v2769, %v2768
    %v2780 = vpack.c.b16 %v2771, %v2770
    %v2781 = vpack.c.b16 %v2773, %v2772
    %2790 = vmatprep.subr.bf16.mxu0 0
    %2791 = vmatpush1.bf16.msra.mxu0 %v2781
    %2792 = vmatprep.subr.bf16.mxu0 0
    %2793 = vmatpush1.bf16.msra.mxu0 %v2780
    %2794 = vmatprep.subr.bf16.mxu0 0
    %2795 = vmatpush1.bf16.msra.mxu0 %v2779
    %2796 = vmatprep.subr.bf16.mxu0 0
    %2797 = vmatpush1.bf16.msra.mxu0 %v2778
    %2798 = vmatprep.subr.bf16.mxu0 0
    %2799 = vmatpush1.bf16.msra.mxu0 %v2777
    %2800 = vmatprep.subr.bf16.mxu0 0
    %2801 = vmatpush1.bf16.msra.mxu0 %v2776
    %2802 = vmatprep.subr.bf16.mxu0 0
    %2803 = vmatpush1.bf16.msra.mxu0 %v2775
    %2804 = vmatprep.subr.bf16.mxu0 0
    %2805 = vmatpush1.bf16.msra.mxu0 %v2774
    %2806 = vmatprep.subr.bf16.mxu0 0
    %2807 = vmatpush2.bf16.msra.mxu0 0
    %2808 = vmatprep.subr.bf16.mxu0 0
    %2809 = vmatpush2.bf16.msra.mxu0 0
    %2810 = vmatprep.subr.bf16.mxu0 0
    %2811 = vmatpush2.bf16.msra.mxu0 0
    %2812 = vmatprep.subr.bf16.mxu0 0
    %2813 = vmatpush2.bf16.msra.mxu0 0
    %2814 = vmatprep.subr.bf16.mxu0 0
    %2815 = vmatpush2.bf16.msra.mxu0 0
    %2816 = vmatprep.subr.bf16.mxu0 0
    %2817 = vmatpush2.bf16.msra.mxu0 0
    %2818 = vmatprep.subr.bf16.mxu0 0
    %2819 = vmatpush2.bf16.msra.mxu0 0
    %2820 = vmatprep.subr.bf16.mxu0 0
    %2821 = vmatpush2.bf16.msra.mxu0 0
    %2822 = vmatprep.mubr.bf16.mxu0 0
    %2823 = vmatmul.mubr.bf16.gmra.mxu0 %v2718
    %v2824 = vpop.f32.mrf.mxu0
    %v2825 = vadd.f32 %v2740, %v2824
    %v2826 = vpop.f32.mrf.mxu0
    %v2827 = vpop.f32.mrf.mxu0
    %v2828 = vadd.f32 %v2740, %v2827
    %v2829 = vpop.f32.mrf.mxu0
    %2830 = vdwg.mxu0
    %2831 = vst [vmem:[#allocation13] sm:$0xff] %v2825
    %2832 = vst [vmem:[#allocation13 + $0x8] sm:$0xff] %v2828
    // Predicated region
    $region62: #{tpu_custom_call.1} parent=1 // pred_check
      _
    $region63: #{tpu_custom_call.1} parent=1 // pred_check_branch
      %2834 = sbr.rel (0) target = $region65
    $region64: #{tpu_custom_call.1} parent=1 // pred_region
      %s2836 = ssub.s32 256, 256
      %2837 = vsyncadd [#allocation4], %s2836
      %s2838 = sshll.u32 [#allocation13], 4
      %s2839 = int_to_ptr.vmem [resolvable:$true] %s2838
      %2844 = dma.vmem_to_hbm [thread:$0]  %s2839, 256, %s9, [#allocation4], 128, 128, 8
    $region65: #{tpu_custom_call.1} parent=1 // pred_fallthru
      _
    // Predicated region
    $region66: #{tpu_custom_call.1} parent=1 // pred_check
      _
    $region67: #{tpu_custom_call.1} parent=1 // pred_check_branch
      %2846 = sbr.rel (0) target = $region69
    $region68: #{tpu_custom_call.1} parent=1 // pred_region
      %2847 = dma.done [#allocation4], 256
    $region69: #{tpu_custom_call.1} parent=1 // pred_fallthru
      _
    %2848 = vsyncpa [#allocation3], 1
    %2849 = vsyncpa [#allocation6], 1
    %2850 = vsyncpa [#allocation9], 1
    %2851 = vsyncpa [#allocation12], 1
    %2852 = vsyncpa [#allocation4], 1

</llo_original>
